<compile_context>
chip_gen: v6e
topology: v6e:2x2x1
jax: 0.10.0
libtpu: 0.0.40
codegen_flags: <defaults>
</compile_context>

<pallas_src>
import functools

import jax
import jax.numpy as jnp
from jax.experimental import pallas as pl
from jax.experimental.pallas import tpu as pltpu


def _round_up(x, m):
    return ((x + m - 1) // m) * m


def _qnet_kernel(obs_ref, act_ref, w1o_ref, w1a_ref, b1_ref, w2_ref, b2_ref,
                 w3r_ref, b3_ref, o_ref, *, n_actions, a_dim):
    # obs_ref: [TB, o_dim]   act_ref: [TB, n_actions*a_dim]   o_ref: [TB, n_actions]
    tb = obs_ref.shape[0]

    # Hoist all weight/bias loads out of the per-action loop.
    w1a = w1a_ref[...]
    b1 = b1_ref[...]
    w2 = w2_ref[...]
    b2 = b2_ref[...]
    w3r = w3r_ref[...]          # fc3 weight as a [1, H] row
    b3 = b3_ref[...]            # [1, 1]

    # Observation projection is shared by all actions of this row tile: do it once.
    obs_proj = jnp.dot(obs_ref[...], w1o_ref[...],
                       preferred_element_type=jnp.float32)

    col_ids = jax.lax.broadcasted_iota(jnp.int32, (tb, n_actions), 1)
    q_out = jnp.zeros((tb, n_actions), jnp.float32)

    for n in range(n_actions):                      # static unroll; n_actions is small
        act_n = act_ref[:, n * a_dim:(n + 1) * a_dim]          # [TB, a_dim]
        h1 = obs_proj + jnp.dot(act_n, w1a,
                                preferred_element_type=jnp.float32) + b1
        h1 = jnp.maximum(h1, 0.0)                               # relu1
        h2 = jnp.dot(h1, w2, preferred_element_type=jnp.float32) + b2
        h2 = jnp.maximum(h2, 0.0)                               # relu2
        # fc3 ([H,1] matmul) folded into a VPU reduction.
        q_n = jnp.sum(h2 * w3r, axis=-1, keepdims=True) + b3    # [TB, 1]
        q_out = jnp.where(col_ids == n, q_n, q_out)

    # TODO(synk): output last dim is n_actions (<128) -> masked stores; a fully
    # lane-dense [n_actions, TB] output layout would need an in-kernel transpose.
    o_ref[...] = q_out


def qnet_pallas(observations, actions, params, *, tile_rows=1024):
    """observations: [B, o_dim] f32, actions: [B, N, a_dim] f32 -> q: [B, N] f32."""
    w1, b1, w2, b2, w3, b3 = params
    B, o_dim = observations.shape
    _, n_act, a_dim = actions.shape
    h = w2.shape[0]

    # Split fc1 so obs and actions are read from HBM separately (no concat and
    # no N_ACT-fold duplication of observations):  x @ W1 = obs @ W1o + act @ W1a
    w1_o = w1[:o_dim, :]                    # [o_dim, H]
    w1_a = w1[o_dim:, :]                    # [a_dim, H]
    b1r = b1.reshape(1, h)
    b2r = b2.reshape(1, h)
    w3r = w3.reshape(1, h)                  # fc3 weight as a row vector
    b3r = b3.reshape(1, 1)

    # Flatten actions to [B, N*a_dim] (free row-major reshape) so the action
    # block stays lane-packed instead of padding a_dim up to 128 lanes.
    act2d = actions.reshape(B, n_act * a_dim)

    # Row tiling: large tiles amortize per-grid-step overhead; pad ragged tail
    # in the wrapper (padded rows are finite garbage, sliced off afterwards).
    tb = min(tile_rows, _round_up(B, 128))
    b_pad = _round_up(B, tb)
    obs_p = observations
    if b_pad != B:
        obs_p = jnp.pad(observations, ((0, b_pad - B), (0, 0)))
        act2d = jnp.pad(act2d, ((0, b_pad - B), (0, 0)))

    grid = (b_pad // tb,)

    flops = 2 * b_pad * o_dim * h + 2 * b_pad * n_act * (a_dim * h + h * h + h)
    bytes_accessed = 4 * (b_pad * (o_dim + n_act * a_dim + n_act)
                          + (o_dim + a_dim) * h + h * h + 3 * h + 1)

    q = pl.pallas_call(
        functools.partial(_qnet_kernel, n_actions=n_act, a_dim=a_dim),
        out_shape=jax.ShapeDtypeStruct((b_pad, n_act), jnp.float32),
        grid=grid,
        in_specs=[
            pl.BlockSpec((tb, o_dim), lambda i: (i, 0)),            # obs tile
            pl.BlockSpec((tb, n_act * a_dim), lambda i: (i, 0)),    # action tile
            pl.BlockSpec((o_dim, h), lambda i: (0, 0)),             # W1_obs (resident)
            pl.BlockSpec((a_dim, h), lambda i: (0, 0)),             # W1_act (resident)
            pl.BlockSpec((1, h), lambda i: (0, 0)),                 # b1
            pl.BlockSpec((h, h), lambda i: (0, 0)),                 # W2
            pl.BlockSpec((1, h), lambda i: (0, 0)),                 # b2
            pl.BlockSpec((1, h), lambda i: (0, 0)),                 # W3 row
            pl.BlockSpec((1, 1), lambda i: (0, 0)),                 # b3
        ],
        out_specs=pl.BlockSpec((tb, n_act), lambda i: (i, 0)),
        compiler_params=pltpu.CompilerParams(
            dimension_semantics=("parallel",)),
        cost_estimate=pl.CostEstimate(
            flops=int(flops), transcendentals=0,
            bytes_accessed=int(bytes_accessed)),
    )(obs_p, act2d, w1_o, w1_a, b1r, w2, b2r, w3r, b3r)

    return q[:B]                            # drop padded rows


def qnet_forward(observations, actions, params):
    """Full Qnet.forward with multiple_action_q_function decorator semantics."""
    if actions.ndim == 3 and observations.ndim == 2:
        return qnet_pallas(observations, actions, params)            # [B, N]
    q = qnet_pallas(observations, actions[:, None, :], params)       # [B, 1]
    return jnp.squeeze(q, axis=-1)                                    # [B]


def init_qnet_params(key, o_dim, a_dim, h_size):
    """Deterministic synthetic init; weights stored as [in, out], biases as [out]."""
    k1, k2, k3, k4, k5, k6 = jax.random.split(key, 6)
    d_in = o_dim + a_dim
    w1 = jax.random.normal(k1, (d_in, h_size), jnp.float32) * 0.1
    b1 = jax.random.normal(k2, (h_size,), jnp.float32) * 0.1
    w2 = jax.random.normal(k3, (h_size, h_size), jnp.float32) * 0.1
    b2 = jax.random.normal(k4, (h_size,), jnp.float32) * 0.1
    w3 = jax.random.normal(k5, (h_size, 1), jnp.float32) * 0.1
    b3 = jax.random.normal(k6, (1,), jnp.float32) * 0.1
    return (w1, b1, w2, b2, w3, b3)


def _ref_qnet(obs, act, params):
    """Pure-JAX reference mirroring the PyTorch module exactly."""
    w1, b1, w2, b2, w3, b3 = params

    def mlp(x):
        h1 = jnp.maximum(x @ w1 + b1, 0.0)
        h2 = jnp.maximum(h1 @ w2 + b2, 0.0)
        return jnp.squeeze(h2 @ w3 + b3, -1)

    if act.ndim == 3 and obs.ndim == 2:
        bsz, n = act.shape[0], act.shape[1]
        obs_r = jnp.broadcast_to(obs[:, None, :], (bsz, n, obs.shape[-1]))
        obs_r = obs_r.reshape(-1, obs.shape[-1])
        act_r = act.reshape(-1, act.shape[-1])
        return mlp(jnp.concatenate([obs_r, act_r], axis=-1)).reshape(bsz, n)
    return mlp(jnp.concatenate([obs, act], axis=-1))


if __name__ == "__main__":
    key = jax.random.PRNGKey(0)
    k_obs, k_act, k_param, k_obs2, k_act2 = jax.random.split(key, 5)

    B, N_ACT, O_DIM, A_DIM, H = 2, 4, 8, 4, 32
    observations = jax.random.normal(k_obs, (B, O_DIM), jnp.float32)
    actions = jax.random.normal(k_act, (B, N_ACT, A_DIM), jnp.float32)
    params = init_qnet_params(k_param, O_DIM, A_DIM, H)

    # multiple-actions path: obs [B, o_dim] + actions [B, N, a_dim] -> q [B, N]
    q_multi = jax.block_until_ready(qnet_forward(observations, actions, params))
    assert q_multi.shape == (B, N_ACT), q_multi.shape
    assert jnp.allclose(q_multi, _ref_qnet(observations, actions, params),
                        atol=1e-4, rtol=1e-4)

    # single-action path: obs [B, o_dim] + actions [B, a_dim] -> q [B]
    q_single = jax.block_until_ready(
        qnet_forward(observations, actions[:, 0, :], params))
    assert q_single.shape == (B,), q_single.shape
    assert jnp.allclose(q_single, _ref_qnet(observations, actions[:, 0, :], params),
                        atol=1e-4, rtol=1e-4)

    # larger ragged batch: exercises the multi-tile grid + tail padding path
    B2, N2 = 1300, 3
    obs2 = jax.random.normal(k_obs2, (B2, O_DIM), jnp.float32)
    act2 = jax.random.normal(k_act2, (B2, N2, A_DIM), jnp.float32)
    q_big = jax.block_until_ready(qnet_forward(obs2, act2, params))
    assert q_big.shape == (B2, N2), q_big.shape
    assert jnp.allclose(q_big, _ref_qnet(obs2, act2, params), atol=1e-4, rtol=1e-4)

    print("KERNEL_OK")
</pallas_src>

<mosaic_0001>
module attributes {stable_mosaic.version = 11 : i64} {
  func.func @_qnet_kernel(%arg0: i32, %arg1: memref<128x8xf32, #tpu.memory_space<vmem>>, %arg2: memref<128x16xf32, #tpu.memory_space<vmem>>, %arg3: memref<8x32xf32, #tpu.memory_space<vmem>>, %arg4: memref<4x32xf32, #tpu.memory_space<vmem>>, %arg5: memref<1x32xf32, #tpu.memory_space<vmem>>, %arg6: memref<32x32xf32, #tpu.memory_space<vmem>>, %arg7: memref<1x32xf32, #tpu.memory_space<vmem>>, %arg8: memref<1x32xf32, #tpu.memory_space<vmem>>, %arg9: memref<1x1xf32, #tpu.memory_space<vmem>>, %arg10: memref<128x4xf32, #tpu.memory_space<vmem>>) attributes {dimension_semantics = [#tpu.dimension_semantics<parallel>], iteration_bounds = array<i64: 1>, scalar_prefetch = 0 : i64, scratch_operands = 0 : i64, tpu.core_type = #tpu.core_type<tc>, window_params = [{transform_indices = @transform_0, window_bounds = array<i64: 128, 8>}, {transform_indices = @transform_1, window_bounds = array<i64: 128, 16>}, {pipeline_mode = #tpu.pipeline_mode<synchronous>, transform_indices = @transform_2, window_bounds = array<i64: 8, 32>}, {pipeline_mode = #tpu.pipeline_mode<synchronous>, transform_indices = @transform_3, window_bounds = array<i64: 4, 32>}, {pipeline_mode = #tpu.pipeline_mode<synchronous>, transform_indices = @transform_4, window_bounds = array<i64: 1, 32>}, {pipeline_mode = #tpu.pipeline_mode<synchronous>, transform_indices = @transform_5, window_bounds = array<i64: 32, 32>}, {pipeline_mode = #tpu.pipeline_mode<synchronous>, transform_indices = @transform_6, window_bounds = array<i64: 1, 32>}, {pipeline_mode = #tpu.pipeline_mode<synchronous>, transform_indices = @transform_7, window_bounds = array<i64: 1, 32>}, {pipeline_mode = #tpu.pipeline_mode<synchronous>, transform_indices = @transform_8, window_bounds = array<i64: 1, 1>}, {transform_indices = @transform_9, window_bounds = array<i64: 128, 4>}]} {
    %c0 = arith.constant 0 : index
    %c0_0 = arith.constant 0 : index
    %0 = vector.load %arg4[%c0, %c0_0] : memref<4x32xf32, #tpu.memory_space<vmem>>, vector<4x32xf32>
    %c0_1 = arith.constant 0 : index
    %c0_2 = arith.constant 0 : index
    %1 = vector.load %arg5[%c0_1, %c0_2] : memref<1x32xf32, #tpu.memory_space<vmem>>, vector<1x32xf32>
    %c0_3 = arith.constant 0 : index
    %c0_4 = arith.constant 0 : index
    %2 = vector.load %arg6[%c0_3, %c0_4] : memref<32x32xf32, #tpu.memory_space<vmem>>, vector<32x32xf32>
    %c0_5 = arith.constant 0 : index
    %c0_6 = arith.constant 0 : index
    %3 = vector.load %arg7[%c0_5, %c0_6] : memref<1x32xf32, #tpu.memory_space<vmem>>, vector<1x32xf32>
    %c0_7 = arith.constant 0 : index
    %c0_8 = arith.constant 0 : index
    %4 = vector.load %arg8[%c0_7, %c0_8] : memref<1x32xf32, #tpu.memory_space<vmem>>, vector<1x32xf32>
    %c0_9 = arith.constant 0 : index
    %c0_10 = arith.constant 0 : index
    %5 = vector.load %arg9[%c0_9, %c0_10] : memref<1x1xf32, #tpu.memory_space<vmem>>, vector<1x1xf32>
    %c0_11 = arith.constant 0 : index
    %c0_12 = arith.constant 0 : index
    %6 = vector.load %arg1[%c0_11, %c0_12] : memref<128x8xf32, #tpu.memory_space<vmem>>, vector<128x8xf32>
    %c0_13 = arith.constant 0 : index
    %c0_14 = arith.constant 0 : index
    %7 = vector.load %arg3[%c0_13, %c0_14] : memref<8x32xf32, #tpu.memory_space<vmem>>, vector<8x32xf32>
    %cst = arith.constant dense<0.000000e+00> : vector<128x32xf32>
    %8 = tpu.matmul %6, %7, %cst {dimension_numbers = #tpu.dot_dimension_numbers<[1], [0], [0], [1], [0, 0, 1, 1], [], []>} : vector<128x8xf32>, vector<8x32xf32>, vector<128x32xf32> -> vector<128x32xf32>
    %9 = tpu.iota {dimensions = array<i32: 1>} : vector<128x4xi32>
    %cst_15 = arith.constant 0.000000e+00 : f32
    %10 = vector.broadcast %cst_15 : f32 to vector<128x4xf32>
    %c0_16 = arith.constant 0 : index
    %c0_17 = arith.constant 0 : index
    %11 = vector.load %arg2[%c0_16, %c0_17] : memref<128x16xf32, #tpu.memory_space<vmem>>, vector<128x4xf32>
    %cst_18 = arith.constant dense<0.000000e+00> : vector<128x32xf32>
    %12 = tpu.matmul %11, %0, %cst_18 {dimension_numbers = #tpu.dot_dimension_numbers<[1], [0], [0], [1], [0, 0, 1, 1], [], []>} : vector<128x4xf32>, vector<4x32xf32>, vector<128x32xf32> -> vector<128x32xf32>
    %13 = arith.addf %8, %12 : vector<128x32xf32>
    %14 = vector.broadcast %1 : vector<1x32xf32> to vector<128x32xf32>
    %15 = arith.addf %13, %14 : vector<128x32xf32>
    %cst_19 = arith.constant 0.000000e+00 : f32
    %16 = vector.broadcast %cst_19 : f32 to vector<128x32xf32>
    %17 = arith.maximumf %15, %16 : vector<128x32xf32>
    %cst_20 = arith.constant dense<0.000000e+00> : vector<128x32xf32>
    %18 = tpu.matmul %17, %2, %cst_20 {dimension_numbers = #tpu.dot_dimension_numbers<[1], [0], [0], [1], [0, 0, 1, 1], [], []>} : vector<128x32xf32>, vector<32x32xf32>, vector<128x32xf32> -> vector<128x32xf32>
    %19 = vector.broadcast %3 : vector<1x32xf32> to vector<128x32xf32>
    %20 = arith.addf %18, %19 : vector<128x32xf32>
    %cst_21 = arith.constant 0.000000e+00 : f32
    %21 = vector.broadcast %cst_21 : f32 to vector<128x32xf32>
    %22 = arith.maximumf %20, %21 : vector<128x32xf32>
    %23 = vector.broadcast %4 : vector<1x32xf32> to vector<128x32xf32>
    %24 = arith.mulf %22, %23 : vector<128x32xf32>
    %cst_22 = arith.constant dense<0.000000e+00> : vector<128xf32>
    %25 = vector.multi_reduction <add>, %24, %cst_22 [1] : vector<128x32xf32> to vector<128xf32>
    %26 = vector.shape_cast %25 : vector<128xf32> to vector<128x1xf32>
    %27 = vector.broadcast %5 : vector<1x1xf32> to vector<128x1xf32>
    %28 = arith.addf %26, %27 : vector<128x1xf32>
    %c0_i32 = arith.constant 0 : i32
    %29 = vector.broadcast %c0_i32 : i32 to vector<128x4xi32>
    %30 = arith.cmpi eq, %9, %29 : vector<128x4xi32>
    %31 = vector.shape_cast %28 : vector<128x1xf32> to vector<128x1xf32>
    %32 = vector.broadcast %31 : vector<128x1xf32> to vector<128x4xf32>
    %33 = arith.select %30, %32, %10 : vector<128x4xi1>, vector<128x4xf32>
    %c0_23 = arith.constant 0 : index
    %c4 = arith.constant 4 : index
    %34 = vector.load %arg2[%c0_23, %c4] : memref<128x16xf32, #tpu.memory_space<vmem>>, vector<128x4xf32>
    %cst_24 = arith.constant dense<0.000000e+00> : vector<128x32xf32>
    %35 = tpu.matmul %34, %0, %cst_24 {dimension_numbers = #tpu.dot_dimension_numbers<[1], [0], [0], [1], [0, 0, 1, 1], [], []>} : vector<128x4xf32>, vector<4x32xf32>, vector<128x32xf32> -> vector<128x32xf32>
    %36 = arith.addf %8, %35 : vector<128x32xf32>
    %37 = vector.broadcast %1 : vector<1x32xf32> to vector<128x32xf32>
    %38 = arith.addf %36, %37 : vector<128x32xf32>
    %cst_25 = arith.constant 0.000000e+00 : f32
    %39 = vector.broadcast %cst_25 : f32 to vector<128x32xf32>
    %40 = arith.maximumf %38, %39 : vector<128x32xf32>
    %cst_26 = arith.constant dense<0.000000e+00> : vector<128x32xf32>
    %41 = tpu.matmul %40, %2, %cst_26 {dimension_numbers = #tpu.dot_dimension_numbers<[1], [0], [0], [1], [0, 0, 1, 1], [], []>} : vector<128x32xf32>, vector<32x32xf32>, vector<128x32xf32> -> vector<128x32xf32>
    %42 = vector.broadcast %3 : vector<1x32xf32> to vector<128x32xf32>
    %43 = arith.addf %41, %42 : vector<128x32xf32>
    %cst_27 = arith.constant 0.000000e+00 : f32
    %44 = vector.broadcast %cst_27 : f32 to vector<128x32xf32>
    %45 = arith.maximumf %43, %44 : vector<128x32xf32>
    %46 = vector.broadcast %4 : vector<1x32xf32> to vector<128x32xf32>
    %47 = arith.mulf %45, %46 : vector<128x32xf32>
    %cst_28 = arith.constant dense<0.000000e+00> : vector<128xf32>
    %48 = vector.multi_reduction <add>, %47, %cst_28 [1] : vector<128x32xf32> to vector<128xf32>
    %49 = vector.shape_cast %48 : vector<128xf32> to vector<128x1xf32>
    %50 = vector.broadcast %5 : vector<1x1xf32> to vector<128x1xf32>
    %51 = arith.addf %49, %50 : vector<128x1xf32>
    %c1_i32 = arith.constant 1 : i32
    %52 = vector.broadcast %c1_i32 : i32 to vector<128x4xi32>
    %53 = arith.cmpi eq, %9, %52 : vector<128x4xi32>
    %54 = vector.shape_cast %51 : vector<128x1xf32> to vector<128x1xf32>
    %55 = vector.broadcast %54 : vector<128x1xf32> to vector<128x4xf32>
    %56 = arith.select %53, %55, %33 : vector<128x4xi1>, vector<128x4xf32>
    %c0_29 = arith.constant 0 : index
    %c8 = arith.constant 8 : index
    %57 = vector.load %arg2[%c0_29, %c8] : memref<128x16xf32, #tpu.memory_space<vmem>>, vector<128x4xf32>
    %cst_30 = arith.constant dense<0.000000e+00> : vector<128x32xf32>
    %58 = tpu.matmul %57, %0, %cst_30 {dimension_numbers = #tpu.dot_dimension_numbers<[1], [0], [0], [1], [0, 0, 1, 1], [], []>} : vector<128x4xf32>, vector<4x32xf32>, vector<128x32xf32> -> vector<128x32xf32>
    %59 = arith.addf %8, %58 : vector<128x32xf32>
    %60 = vector.broadcast %1 : vector<1x32xf32> to vector<128x32xf32>
    %61 = arith.addf %59, %60 : vector<128x32xf32>
    %cst_31 = arith.constant 0.000000e+00 : f32
    %62 = vector.broadcast %cst_31 : f32 to vector<128x32xf32>
    %63 = arith.maximumf %61, %62 : vector<128x32xf32>
    %cst_32 = arith.constant dense<0.000000e+00> : vector<128x32xf32>
    %64 = tpu.matmul %63, %2, %cst_32 {dimension_numbers = #tpu.dot_dimension_numbers<[1], [0], [0], [1], [0, 0, 1, 1], [], []>} : vector<128x32xf32>, vector<32x32xf32>, vector<128x32xf32> -> vector<128x32xf32>
    %65 = vector.broadcast %3 : vector<1x32xf32> to vector<128x32xf32>
    %66 = arith.addf %64, %65 : vector<128x32xf32>
    %cst_33 = arith.constant 0.000000e+00 : f32
    %67 = vector.broadcast %cst_33 : f32 to vector<128x32xf32>
    %68 = arith.maximumf %66, %67 : vector<128x32xf32>
    %69 = vector.broadcast %4 : vector<1x32xf32> to vector<128x32xf32>
    %70 = arith.mulf %68, %69 : vector<128x32xf32>
    %cst_34 = arith.constant dense<0.000000e+00> : vector<128xf32>
    %71 = vector.multi_reduction <add>, %70, %cst_34 [1] : vector<128x32xf32> to vector<128xf32>
    %72 = vector.shape_cast %71 : vector<128xf32> to vector<128x1xf32>
    %73 = vector.broadcast %5 : vector<1x1xf32> to vector<128x1xf32>
    %74 = arith.addf %72, %73 : vector<128x1xf32>
    %c2_i32 = arith.constant 2 : i32
    %75 = vector.broadcast %c2_i32 : i32 to vector<128x4xi32>
    %76 = arith.cmpi eq, %9, %75 : vector<128x4xi32>
    %77 = vector.shape_cast %74 : vector<128x1xf32> to vector<128x1xf32>
    %78 = vector.broadcast %77 : vector<128x1xf32> to vector<128x4xf32>
    %79 = arith.select %76, %78, %56 : vector<128x4xi1>, vector<128x4xf32>
    %c0_35 = arith.constant 0 : index
    %c12 = arith.constant 12 : index
    %80 = vector.load %arg2[%c0_35, %c12] : memref<128x16xf32, #tpu.memory_space<vmem>>, vector<128x4xf32>
    %cst_36 = arith.constant dense<0.000000e+00> : vector<128x32xf32>
    %81 = tpu.matmul %80, %0, %cst_36 {dimension_numbers = #tpu.dot_dimension_numbers<[1], [0], [0], [1], [0, 0, 1, 1], [], []>} : vector<128x4xf32>, vector<4x32xf32>, vector<128x32xf32> -> vector<128x32xf32>
    %82 = arith.addf %8, %81 : vector<128x32xf32>
    %83 = vector.broadcast %1 : vector<1x32xf32> to vector<128x32xf32>
    %84 = arith.addf %82, %83 : vector<128x32xf32>
    %cst_37 = arith.constant 0.000000e+00 : f32
    %85 = vector.broadcast %cst_37 : f32 to vector<128x32xf32>
    %86 = arith.maximumf %84, %85 : vector<128x32xf32>
    %cst_38 = arith.constant dense<0.000000e+00> : vector<128x32xf32>
    %87 = tpu.matmul %86, %2, %cst_38 {dimension_numbers = #tpu.dot_dimension_numbers<[1], [0], [0], [1], [0, 0, 1, 1], [], []>} : vector<128x32xf32>, vector<32x32xf32>, vector<128x32xf32> -> vector<128x32xf32>
    %88 = vector.broadcast %3 : vector<1x32xf32> to vector<128x32xf32>
    %89 = arith.addf %87, %88 : vector<128x32xf32>
    %cst_39 = arith.constant 0.000000e+00 : f32
    %90 = vector.broadcast %cst_39 : f32 to vector<128x32xf32>
    %91 = arith.maximumf %89, %90 : vector<128x32xf32>
    %92 = vector.broadcast %4 : vector<1x32xf32> to vector<128x32xf32>
    %93 = arith.mulf %91, %92 : vector<128x32xf32>
    %cst_40 = arith.constant dense<0.000000e+00> : vector<128xf32>
    %94 = vector.multi_reduction <add>, %93, %cst_40 [1] : vector<128x32xf32> to vector<128xf32>
    %95 = vector.shape_cast %94 : vector<128xf32> to vector<128x1xf32>
    %96 = vector.broadcast %5 : vector<1x1xf32> to vector<128x1xf32>
    %97 = arith.addf %95, %96 : vector<128x1xf32>
    %c3_i32 = arith.constant 3 : i32
    %98 = vector.broadcast %c3_i32 : i32 to vector<128x4xi32>
    %99 = arith.cmpi eq, %9, %98 : vector<128x4xi32>
    %100 = vector.shape_cast %97 : vector<128x1xf32> to vector<128x1xf32>
    %101 = vector.broadcast %100 : vector<128x1xf32> to vector<128x4xf32>
    %102 = arith.select %99, %101, %79 : vector<128x4xi1>, vector<128x4xf32>
    %c0_41 = arith.constant 0 : index
    %c0_42 = arith.constant 0 : index
    %103 = vector.load %arg10[%c0_41, %c0_42] : memref<128x4xf32, #tpu.memory_space<vmem>>, vector<128x4xf32>
    tpu.vector_store %arg10[%c0_41, %c0_42], %102 {strides = array<i32>} : memref<128x4xf32, #tpu.memory_space<vmem>>, vector<128x4xf32>,
    return
  }
  func.func @transform_0(%arg0: i32) -> (i32, i32) {
    %c0_i32 = arith.constant 0 : i32
    %c0_i32_0 = arith.constant 0 : i32
    return %arg0, %c0_i32 : i32, i32
  }
  func.func @transform_1(%arg0: i32) -> (i32, i32) {
    %c0_i32 = arith.constant 0 : i32
    %c0_i32_0 = arith.constant 0 : i32
    return %arg0, %c0_i32 : i32, i32
  }
  func.func @transform_2(%arg0: i32) -> (i32, i32) {
    %c0_i32 = arith.constant 0 : i32
    %c0_i32_0 = arith.constant 0 : i32
    %c0_i32_1 = arith.constant 0 : i32
    return %c0_i32, %c0_i32_0 : i32, i32
  }
  func.func @transform_3(%arg0: i32) -> (i32, i32) {
    %c0_i32 = arith.constant 0 : i32
    %c0_i32_0 = arith.constant 0 : i32
    %c0_i32_1 = arith.constant 0 : i32
    return %c0_i32, %c0_i32_0 : i32, i32
  }
  func.func @transform_4(%arg0: i32) -> (i32, i32) {
    %c0_i32 = arith.constant 0 : i32
    %c0_i32_0 = arith.constant 0 : i32
    %c0_i32_1 = arith.constant 0 : i32
    return %c0_i32, %c0_i32_0 : i32, i32
  }
  func.func @transform_5(%arg0: i32) -> (i32, i32) {
    %c0_i32 = arith.constant 0 : i32
    %c0_i32_0 = arith.constant 0 : i32
    %c0_i32_1 = arith.constant 0 : i32
    return %c0_i32, %c0_i32_0 : i32, i32
  }
  func.func @transform_6(%arg0: i32) -> (i32, i32) {
    %c0_i32 = arith.constant 0 : i32
    %c0_i32_0 = arith.constant 0 : i32
    %c0_i32_1 = arith.constant 0 : i32
    return %c0_i32, %c0_i32_0 : i32, i32
  }
  func.func @transform_7(%arg0: i32) -> (i32, i32) {
    %c0_i32 = arith.constant 0 : i32
    %c0_i32_0 = arith.constant 0 : i32
    %c0_i32_1 = arith.constant 0 : i32
    return %c0_i32, %c0_i32_0 : i32, i32
  }
  func.func @transform_8(%arg0: i32) -> (i32, i32) {
    %c0_i32 = arith.constant 0 : i32
    %c0_i32_0 = arith.constant 0 : i32
    %c0_i32_1 = arith.constant 0 : i32
    return %c0_i32, %c0_i32_0 : i32, i32
  }
  func.func @transform_9(%arg0: i32) -> (i32, i32) {
    %c0_i32 = arith.constant 0 : i32
    %c0_i32_0 = arith.constant 0 : i32
    return %arg0, %c0_i32 : i32, i32
  }
}

</mosaic_0001>

<llo_original>
// kernel: tpu_custom_call.1
$region0: #{tpu_custom_call.1}
  #allocation0 [shape = 'u32[]', space=smem, size = 0x4, offset = 0x4, fixed_abs, tag = 'smem constant byte address 0x4 - core index']
  #allocation1 [shape = 'u32[144,128]{1,0:T(1,128)}', space=vmem, size = 0x12000, scoped, tag = 'internal scratch']
  #allocation2 [shape = 'f32[1,1]{1,0:T(1,128)S(1)}', space=vmem, size = 0x200, scoped, tag = 'scoped memory for tpu_custom_call.1']
  %s0 = inlined_call_operand.vmem [shape: f32[128,8], index: 0, kind: input, shape index: {}]
  %s1 = inlined_call_operand.vmem [shape: f32[128,16], index: 1, kind: input, shape index: {}]
  %s2 = inlined_call_operand.vmem [shape: f32[8,32], index: 2, kind: input, shape index: {}]
  %s3 = inlined_call_operand.vmem [shape: f32[4,32], index: 3, kind: input, shape index: {}]
  %s4 = inlined_call_operand.vmem [shape: f32[1,32], index: 4, kind: input, shape index: {}]
  %s5 = inlined_call_operand.vmem [shape: f32[32,32], index: 5, kind: input, shape index: {}]
  %s6 = inlined_call_operand.vmem [shape: f32[1,32], index: 6, kind: input, shape index: {}]
  %s7 = inlined_call_operand.vmem [shape: f32[1,32], index: 7, kind: input, shape index: {}]
  %s8 = inlined_call_operand.<no memory space> [shape: f32[1,1], index: 8, kind: input, shape index: {}]
  %s9 = inlined_call_operand.vmem [shape: f32[128,4], index: 9, kind: output, shape index: {}]
  %s10 = sld [smem:[#allocation0]]
  $region46: #{tpu_custom_call.1} parent=0
    _
  %s12 = ssub.s32 1, %s10
  %s13 = scalar_select 0, %s12, %s10
  %v14 = vstv %s8
  %15 = vst [vmem:[#allocation2] sm:$0x1] %v14
  // Predicated region
  $region2: #{tpu_custom_call.1} parent=0 // pred_check
    _
  $region3: #{tpu_custom_call.1} parent=0 // pred_check_branch
    %17 = sbr.rel (0) target = $region5
  $region4: #{tpu_custom_call.1} parent=0 // pred_region
    _
  $region5: #{tpu_custom_call.1} parent=0 // pred_fallthru
    _
  // Predicated region
  $region6: #{tpu_custom_call.1} parent=0 // pred_check
    _
  $region7: #{tpu_custom_call.1} parent=0 // pred_check_branch
    %19 = sbr.rel (0) target = $region9
  $region8: #{tpu_custom_call.1} parent=0 // pred_region
    _
  $region9: #{tpu_custom_call.1} parent=0 // pred_fallthru
    _
  // Predicated region
  $region10: #{tpu_custom_call.1} parent=0 // pred_check
    _
  $region11: #{tpu_custom_call.1} parent=0 // pred_check_branch
    %21 = sbr.rel (0) target = $region13
  $region12: #{tpu_custom_call.1} parent=0 // pred_region
    _
  $region13: #{tpu_custom_call.1} parent=0 // pred_fallthru
    _
  // Predicated region
  $region14: #{tpu_custom_call.1} parent=0 // pred_check
    _
  $region15: #{tpu_custom_call.1} parent=0 // pred_check_branch
    %23 = sbr.rel (0) target = $region17
  $region16: #{tpu_custom_call.1} parent=0 // pred_region
    _
  $region17: #{tpu_custom_call.1} parent=0 // pred_fallthru
    _
  // Predicated region
  $region18: #{tpu_custom_call.1} parent=0 // pred_check
    _
  $region19: #{tpu_custom_call.1} parent=0 // pred_check_branch
    %25 = sbr.rel (0) target = $region21
  $region20: #{tpu_custom_call.1} parent=0 // pred_region
    _
  $region21: #{tpu_custom_call.1} parent=0 // pred_fallthru
    _
  // Predicated region
  $region22: #{tpu_custom_call.1} parent=0 // pred_check
    _
  $region23: #{tpu_custom_call.1} parent=0 // pred_check_branch
    %27 = sbr.rel (0) target = $region25
  $region24: #{tpu_custom_call.1} parent=0 // pred_region
    _
  $region25: #{tpu_custom_call.1} parent=0 // pred_fallthru
    _
  // Predicated region
  $region26: #{tpu_custom_call.1} parent=0 // pred_check
    _
  $region27: #{tpu_custom_call.1} parent=0 // pred_check_branch
    %29 = sbr.rel (0) target = $region29
  $region28: #{tpu_custom_call.1} parent=0 // pred_region
    _
  $region29: #{tpu_custom_call.1} parent=0 // pred_fallthru
    _
  // Predicated region
  $region30: #{tpu_custom_call.1} parent=0 // pred_check
    _
  $region31: #{tpu_custom_call.1} parent=0 // pred_check_branch
    %31 = sbr.rel (0) target = $region33
  $region32: #{tpu_custom_call.1} parent=0 // pred_region
    _
  $region33: #{tpu_custom_call.1} parent=0 // pred_fallthru
    _
  // Predicated region
  $region34: #{tpu_custom_call.1} parent=0 // pred_check
    _
  $region35: #{tpu_custom_call.1} parent=0 // pred_check_branch
    %33 = sbr.rel (0) target = $region37
  $region36: #{tpu_custom_call.1} parent=0 // pred_region
    _
  $region37: #{tpu_custom_call.1} parent=0 // pred_fallthru
    _
  %v34 = vld [vmem:[%s3] sm:$0xf]
  %v35 = vld [vmem:[%s4] sm:$0x1]
  %v36 = vld [vmem:[%s5] sm:$0xff]
  %v37 = vld [vmem:[%s5 + $0x8] sm:$0xff]
  %v38 = vld [vmem:[%s5 + $0x10] sm:$0xff]
  %v39 = vld [vmem:[%s5 + $0x18] sm:$0xff]
  %v40 = vld [vmem:[%s6] sm:$0x1]
  %v41 = vld [vmem:[%s7] sm:$0x1]
  %v42 = vld [vmem:[#allocation2] sm:$0x1]
  %v43 = vld [vmem:[%s0] sm:$0xff]
  %v44 = vld [vmem:[%s0 + $0x8] sm:$0xff]
  %v45 = vld [vmem:[%s0 + $0x10] sm:$0xff]
  %v46 = vld [vmem:[%s0 + $0x18] sm:$0xff]
  %v47 = vld [vmem:[%s0 + $0x20] sm:$0xff]
  %v48 = vld [vmem:[%s0 + $0x28] sm:$0xff]
  %v49 = vld [vmem:[%s0 + $0x30] sm:$0xff]
  %v50 = vld [vmem:[%s0 + $0x38] sm:$0xff]
  %v51 = vld [vmem:[%s0 + $0x40] sm:$0xff]
  %v52 = vld [vmem:[%s0 + $0x48] sm:$0xff]
  %v53 = vld [vmem:[%s0 + $0x50] sm:$0xff]
  %v54 = vld [vmem:[%s0 + $0x58] sm:$0xff]
  %v55 = vld [vmem:[%s0 + $0x60] sm:$0xff]
  %v56 = vld [vmem:[%s0 + $0x68] sm:$0xff]
  %v57 = vld [vmem:[%s0 + $0x70] sm:$0xff]
  %v58 = vld [vmem:[%s0 + $0x78] sm:$0xff]
  %v59 = vld [vmem:[%s2] sm:$0xff]
  %vm60 = vcmask 64512
  %v62 = vsel %vm60, %v43, 0
  %v65 = vsel %vm60, %v44, 0
  %v68 = vsel %vm60, %v45, 0
  %v71 = vsel %vm60, %v46, 0
  %v74 = vsel %vm60, %v47, 0
  %v77 = vsel %vm60, %v48, 0
  %v80 = vsel %vm60, %v49, 0
  %v83 = vsel %vm60, %v50, 0
  %v86 = vsel %vm60, %v51, 0
  %v89 = vsel %vm60, %v52, 0
  %v92 = vsel %vm60, %v53, 0
  %v95 = vsel %vm60, %v54, 0
  %v98 = vsel %vm60, %v55, 0
  %v101 = vsel %vm60, %v56, 0
  %v104 = vsel %vm60, %v57, 0
  %v107 = vsel %vm60, %v58, 0
  %109 = vmatprep.subr.mxu0 0.0
  %110 = vmatpush1.msra.mxu0 0.0
  %111 = vmatprep.subr.mxu0 0.0
  %112 = vmatpush1.msra.mxu0 0.0
  %113 = vmatprep.subr.mxu0 0.0
  %114 = vmatpush1.msra.mxu0 0.0
  %115 = vmatprep.subr.mxu0 0.0
  %116 = vmatpush1.msra.mxu0 0.0
  %117 = vmatprep.subr.mxu0 0.0
  %118 = vmatpush1.msra.mxu0 0.0
  %119 = vmatprep.subr.mxu0 0.0
  %120 = vmatpush1.msra.mxu0 0.0
  %121 = vmatprep.subr.mxu0 0.0
  %122 = vmatpush1.msra.mxu0 0.0
  %123 = vmatprep.subr.mxu0 0.0
  %124 = vmatpush1.msra.mxu0 0.0
  %125 = vmatprep.subr.mxu0 0.0
  %126 = vmatpush1.msra.mxu0 0.0
  %127 = vmatprep.subr.mxu0 0.0
  %128 = vmatpush1.msra.mxu0 0.0
  %129 = vmatprep.subr.mxu0 0.0
  %130 = vmatpush1.msra.mxu0 0.0
  %131 = vmatprep.subr.mxu0 0.0
  %132 = vmatpush1.msra.mxu0 0.0
  %133 = vmatprep.subr.mxu0 0.0
  %134 = vmatpush1.msra.mxu0 0.0
  %135 = vmatprep.subr.mxu0 0.0
  %136 = vmatpush1.msra.mxu0 0.0
  %137 = vmatprep.subr.mxu0 0.0
  %138 = vmatpush1.msra.mxu0 0.0
  %139 = vmatprep.subr.mxu0 0.0
  %140 = vmatpush1.msra.mxu0 %v59
  %141 = vmatprep.subr.mxu0 0.0
  %142 = vmatpush2.msra.mxu0 0.0
  %143 = vmatprep.subr.mxu0 0.0
  %144 = vmatpush2.msra.mxu0 0.0
  %145 = vmatprep.subr.mxu0 0.0
  %146 = vmatpush2.msra.mxu0 0.0
  %147 = vmatprep.subr.mxu0 0.0
  %148 = vmatpush2.msra.mxu0 0.0
  %149 = vmatprep.subr.mxu0 0.0
  %150 = vmatpush2.msra.mxu0 0.0
  %151 = vmatprep.subr.mxu0 0.0
  %152 = vmatpush2.msra.mxu0 0.0
  %153 = vmatprep.subr.mxu0 0.0
  %154 = vmatpush2.msra.mxu0 0.0
  %155 = vmatprep.subr.mxu0 0.0
  %156 = vmatpush2.msra.mxu0 0.0
  %157 = vmatprep.subr.mxu0 0.0
  %158 = vmatpush2.msra.mxu0 0.0
  %159 = vmatprep.subr.mxu0 0.0
  %160 = vmatpush2.msra.mxu0 0.0
  %161 = vmatprep.subr.mxu0 0.0
  %162 = vmatpush2.msra.mxu0 0.0
  %163 = vmatprep.subr.mxu0 0.0
  %164 = vmatpush2.msra.mxu0 0.0
  %165 = vmatprep.subr.mxu0 0.0
  %166 = vmatpush2.msra.mxu0 0.0
  %167 = vmatprep.subr.mxu0 0.0
  %168 = vmatpush2.msra.mxu0 0.0
  %169 = vmatprep.subr.mxu0 0.0
  %170 = vmatpush2.msra.mxu0 0.0
  %171 = vmatprep.subr.mxu0 0.0
  %172 = vmatpush2.msra.mxu0 0.0
  %173 = vmatprep.mubr.f32.mxu0 0.0
  %174 = vmatmul.mubr.f32.gmra.mxu0 %v62
  %v175 = vpop.f32.mrf.mxu0
  %v176 = vadd.f32 0.0, %v175
  %v177 = vpop.f32.mrf.mxu0
  %178 = vmatprep.mubr.f32.mxu0 0.0
  %179 = vmatmul.mubr.f32.gmra.mxu0 %v65
  %v180 = vpop.f32.mrf.mxu0
  %v181 = vadd.f32 0.0, %v180
  %v182 = vpop.f32.mrf.mxu0
  %183 = vmatprep.mubr.f32.mxu0 0.0
  %184 = vmatmul.mubr.f32.gmra.mxu0 %v68
  %v185 = vpop.f32.mrf.mxu0
  %v186 = vadd.f32 0.0, %v185
  %v187 = vpop.f32.mrf.mxu0
  %188 = vmatprep.mubr.f32.mxu0 0.0
  %189 = vmatmul.mubr.f32.gmra.mxu0 %v71
  %v190 = vpop.f32.mrf.mxu0
  %v191 = vadd.f32 0.0, %v190
  %v192 = vpop.f32.mrf.mxu0
  %193 = vmatprep.mubr.f32.mxu0 0.0
  %194 = vmatmul.mubr.f32.gmra.mxu0 %v74
  %v195 = vpop.f32.mrf.mxu0
  %v196 = vadd.f32 0.0, %v195
  %v197 = vpop.f32.mrf.mxu0
  %198 = vmatprep.mubr.f32.mxu0 0.0
  %199 = vmatmul.mubr.f32.gmra.mxu0 %v77
  %v200 = vpop.f32.mrf.mxu0
  %v201 = vadd.f32 0.0, %v200
  %v202 = vpop.f32.mrf.mxu0
  %203 = vmatprep.mubr.f32.mxu0 0.0
  %204 = vmatmul.mubr.f32.gmra.mxu0 %v80
  %v205 = vpop.f32.mrf.mxu0
  %v206 = vadd.f32 0.0, %v205
  %v207 = vpop.f32.mrf.mxu0
  %208 = vmatprep.mubr.f32.mxu0 0.0
  %209 = vmatmul.mubr.f32.gmra.mxu0 %v83
  %v210 = vpop.f32.mrf.mxu0
  %v211 = vadd.f32 0.0, %v210
  %v212 = vpop.f32.mrf.mxu0
  %213 = vmatprep.mubr.f32.mxu0 0.0
  %214 = vmatmul.mubr.f32.gmra.mxu0 %v86
  %v215 = vpop.f32.mrf.mxu0
  %v216 = vadd.f32 0.0, %v215
  %v217 = vpop.f32.mrf.mxu0
  %218 = vmatprep.mubr.f32.mxu0 0.0
  %219 = vmatmul.mubr.f32.gmra.mxu0 %v89
  %v220 = vpop.f32.mrf.mxu0
  %v221 = vadd.f32 0.0, %v220
  %v222 = vpop.f32.mrf.mxu0
  %223 = vmatprep.mubr.f32.mxu0 0.0
  %224 = vmatmul.mubr.f32.gmra.mxu0 %v92
  %v225 = vpop.f32.mrf.mxu0
  %v226 = vadd.f32 0.0, %v225
  %v227 = vpop.f32.mrf.mxu0
  %228 = vmatprep.mubr.f32.mxu0 0.0
  %229 = vmatmul.mubr.f32.gmra.mxu0 %v95
  %v230 = vpop.f32.mrf.mxu0
  %v231 = vadd.f32 0.0, %v230
  %v232 = vpop.f32.mrf.mxu0
  %233 = vmatprep.mubr.f32.mxu0 0.0
  %234 = vmatmul.mubr.f32.gmra.mxu0 %v98
  %v235 = vpop.f32.mrf.mxu0
  %v236 = vadd.f32 0.0, %v235
  %v237 = vpop.f32.mrf.mxu0
  %238 = vmatprep.mubr.f32.mxu0 0.0
  %239 = vmatmul.mubr.f32.gmra.mxu0 %v101
  %v240 = vpop.f32.mrf.mxu0
  %v241 = vadd.f32 0.0, %v240
  %v242 = vpop.f32.mrf.mxu0
  %243 = vmatprep.mubr.f32.mxu0 0.0
  %244 = vmatmul.mubr.f32.gmra.mxu0 %v104
  %v245 = vpop.f32.mrf.mxu0
  %v246 = vadd.f32 0.0, %v245
  %v247 = vpop.f32.mrf.mxu0
  %248 = vmatprep.mubr.f32.mxu0 0.0
  %249 = vmatmul.mubr.f32.gmra.mxu0 %v107
  %v250 = vpop.f32.mrf.mxu0
  %v251 = vadd.f32 0.0, %v250
  %v252 = vpop.f32.mrf.mxu0
  %253 = vdwg.mxu0
  %v254 = vlaneseq
  %v255 = vand.u32 %v254, 127
  %v256 = vld [vmem:[%s1] sm:$0xff]
  %v257 = vld [vmem:[%s1 + $0x8] sm:$0xff]
  %v258 = vld [vmem:[%s1 + $0x10] sm:$0xff]
  %v259 = vld [vmem:[%s1 + $0x18] sm:$0xff]
  %v260 = vld [vmem:[%s1 + $0x20] sm:$0xff]
  %v261 = vld [vmem:[%s1 + $0x28] sm:$0xff]
  %v262 = vld [vmem:[%s1 + $0x30] sm:$0xff]
  %v263 = vld [vmem:[%s1 + $0x38] sm:$0xff]
  %v264 = vld [vmem:[%s1 + $0x40] sm:$0xff]
  %v265 = vld [vmem:[%s1 + $0x48] sm:$0xff]
  %v266 = vld [vmem:[%s1 + $0x50] sm:$0xff]
  %v267 = vld [vmem:[%s1 + $0x58] sm:$0xff]
  %v268 = vld [vmem:[%s1 + $0x60] sm:$0xff]
  %v269 = vld [vmem:[%s1 + $0x68] sm:$0xff]
  %v270 = vld [vmem:[%s1 + $0x70] sm:$0xff]
  %v271 = vld [vmem:[%s1 + $0x78] sm:$0xff]
  %vm272 = vcmask 31744
  %v274 = vsel %vm272, %v256, 0
  %v277 = vsel %vm272, %v257, 0
  %v280 = vsel %vm272, %v258, 0
  %v283 = vsel %vm272, %v259, 0
  %v286 = vsel %vm272, %v260, 0
  %v289 = vsel %vm272, %v261, 0
  %v292 = vsel %vm272, %v262, 0
  %v295 = vsel %vm272, %v263, 0
  %v298 = vsel %vm272, %v264, 0
  %v301 = vsel %vm272, %v265, 0
  %v304 = vsel %vm272, %v266, 0
  %v307 = vsel %vm272, %v267, 0
  %v310 = vsel %vm272, %v268, 0
  %v313 = vsel %vm272, %v269, 0
  %v316 = vsel %vm272, %v270, 0
  %v319 = vsel %vm272, %v271, 0
  %vm321 = vcmask 1043456
  %v323 = vsel %vm321, %v34, 0
  %325 = vmatprep.subr.mxu0 0.0
  %326 = vmatpush1.msra.mxu0 0.0
  %327 = vmatprep.subr.mxu0 0.0
  %328 = vmatpush1.msra.mxu0 0.0
  %329 = vmatprep.subr.mxu0 0.0
  %330 = vmatpush1.msra.mxu0 0.0
  %331 = vmatprep.subr.mxu0 0.0
  %332 = vmatpush1.msra.mxu0 0.0
  %333 = vmatprep.subr.mxu0 0.0
  %334 = vmatpush1.msra.mxu0 0.0
  %335 = vmatprep.subr.mxu0 0.0
  %336 = vmatpush1.msra.mxu0 0.0
  %337 = vmatprep.subr.mxu0 0.0
  %338 = vmatpush1.msra.mxu0 0.0
  %339 = vmatprep.subr.mxu0 0.0
  %340 = vmatpush1.msra.mxu0 0.0
  %341 = vmatprep.subr.mxu0 0.0
  %342 = vmatpush1.msra.mxu0 0.0
  %343 = vmatprep.subr.mxu0 0.0
  %344 = vmatpush1.msra.mxu0 0.0
  %345 = vmatprep.subr.mxu0 0.0
  %346 = vmatpush1.msra.mxu0 0.0
  %347 = vmatprep.subr.mxu0 0.0
  %348 = vmatpush1.msra.mxu0 0.0
  %349 = vmatprep.subr.mxu0 0.0
  %350 = vmatpush1.msra.mxu0 0.0
  %351 = vmatprep.subr.mxu0 0.0
  %352 = vmatpush1.msra.mxu0 0.0
  %353 = vmatprep.subr.mxu0 0.0
  %354 = vmatpush1.msra.mxu0 0.0
  %355 = vmatprep.subr.mxu0 0.0
  %356 = vmatpush1.msra.mxu0 %v323
  %357 = vmatprep.subr.mxu0 0.0
  %358 = vmatpush2.msra.mxu0 0.0
  %359 = vmatprep.subr.mxu0 0.0
  %360 = vmatpush2.msra.mxu0 0.0
  %361 = vmatprep.subr.mxu0 0.0
  %362 = vmatpush2.msra.mxu0 0.0
  %363 = vmatprep.subr.mxu0 0.0
  %364 = vmatpush2.msra.mxu0 0.0
  %365 = vmatprep.subr.mxu0 0.0
  %366 = vmatpush2.msra.mxu0 0.0
  %367 = vmatprep.subr.mxu0 0.0
  %368 = vmatpush2.msra.mxu0 0.0
  %369 = vmatprep.subr.mxu0 0.0
  %370 = vmatpush2.msra.mxu0 0.0
  %371 = vmatprep.subr.mxu0 0.0
  %372 = vmatpush2.msra.mxu0 0.0
  %373 = vmatprep.subr.mxu0 0.0
  %374 = vmatpush2.msra.mxu0 0.0
  %375 = vmatprep.subr.mxu0 0.0
  %376 = vmatpush2.msra.mxu0 0.0
  %377 = vmatprep.subr.mxu0 0.0
  %378 = vmatpush2.msra.mxu0 0.0
  %379 = vmatprep.subr.mxu0 0.0
  %380 = vmatpush2.msra.mxu0 0.0
  %381 = vmatprep.subr.mxu0 0.0
  %382 = vmatpush2.msra.mxu0 0.0
  %383 = vmatprep.subr.mxu0 0.0
  %384 = vmatpush2.msra.mxu0 0.0
  %385 = vmatprep.subr.mxu0 0.0
  %386 = vmatpush2.msra.mxu0 0.0
  %387 = vmatprep.subr.mxu0 0.0
  %388 = vmatpush2.msra.mxu0 0.0
  %389 = vmatprep.mubr.f32.mxu0 0.0
  %390 = vmatmul.mubr.f32.gmra.mxu0 %v274
  %v391 = vpop.f32.mrf.mxu0
  %v392 = vadd.f32 0.0, %v391
  %v393 = vpop.f32.mrf.mxu0
  %394 = vmatprep.mubr.f32.mxu0 0.0
  %395 = vmatmul.mubr.f32.gmra.mxu0 %v277
  %v396 = vpop.f32.mrf.mxu0
  %v397 = vadd.f32 0.0, %v396
  %v398 = vpop.f32.mrf.mxu0
  %399 = vmatprep.mubr.f32.mxu0 0.0
  %400 = vmatmul.mubr.f32.gmra.mxu0 %v280
  %v401 = vpop.f32.mrf.mxu0
  %v402 = vadd.f32 0.0, %v401
  %v403 = vpop.f32.mrf.mxu0
  %404 = vmatprep.mubr.f32.mxu0 0.0
  %405 = vmatmul.mubr.f32.gmra.mxu0 %v283
  %v406 = vpop.f32.mrf.mxu0
  %v407 = vadd.f32 0.0, %v406
  %v408 = vpop.f32.mrf.mxu0
  %409 = vmatprep.mubr.f32.mxu0 0.0
  %410 = vmatmul.mubr.f32.gmra.mxu0 %v286
  %v411 = vpop.f32.mrf.mxu0
  %v412 = vadd.f32 0.0, %v411
  %v413 = vpop.f32.mrf.mxu0
  %414 = vmatprep.mubr.f32.mxu0 0.0
  %415 = vmatmul.mubr.f32.gmra.mxu0 %v289
  %v416 = vpop.f32.mrf.mxu0
  %v417 = vadd.f32 0.0, %v416
  %v418 = vpop.f32.mrf.mxu0
  %419 = vmatprep.mubr.f32.mxu0 0.0
  %420 = vmatmul.mubr.f32.gmra.mxu0 %v292
  %v421 = vpop.f32.mrf.mxu0
  %v422 = vadd.f32 0.0, %v421
  %v423 = vpop.f32.mrf.mxu0
  %424 = vmatprep.mubr.f32.mxu0 0.0
  %425 = vmatmul.mubr.f32.gmra.mxu0 %v295
  %v426 = vpop.f32.mrf.mxu0
  %v427 = vadd.f32 0.0, %v426
  %v428 = vpop.f32.mrf.mxu0
  %429 = vmatprep.mubr.f32.mxu0 0.0
  %430 = vmatmul.mubr.f32.gmra.mxu0 %v298
  %v431 = vpop.f32.mrf.mxu0
  %v432 = vadd.f32 0.0, %v431
  %v433 = vpop.f32.mrf.mxu0
  %434 = vmatprep.mubr.f32.mxu0 0.0
  %435 = vmatmul.mubr.f32.gmra.mxu0 %v301
  %v436 = vpop.f32.mrf.mxu0
  %v437 = vadd.f32 0.0, %v436
  %v438 = vpop.f32.mrf.mxu0
  %439 = vmatprep.mubr.f32.mxu0 0.0
  %440 = vmatmul.mubr.f32.gmra.mxu0 %v304
  %v441 = vpop.f32.mrf.mxu0
  %v442 = vadd.f32 0.0, %v441
  %v443 = vpop.f32.mrf.mxu0
  %444 = vmatprep.mubr.f32.mxu0 0.0
  %445 = vmatmul.mubr.f32.gmra.mxu0 %v307
  %v446 = vpop.f32.mrf.mxu0
  %v447 = vadd.f32 0.0, %v446
  %v448 = vpop.f32.mrf.mxu0
  %449 = vmatprep.mubr.f32.mxu0 0.0
  %450 = vmatmul.mubr.f32.gmra.mxu0 %v310
  %v451 = vpop.f32.mrf.mxu0
  %v452 = vadd.f32 0.0, %v451
  %v453 = vpop.f32.mrf.mxu0
  %454 = vmatprep.mubr.f32.mxu0 0.0
  %455 = vmatmul.mubr.f32.gmra.mxu0 %v313
  %v456 = vpop.f32.mrf.mxu0
  %v457 = vadd.f32 0.0, %v456
  %v458 = vpop.f32.mrf.mxu0
  %459 = vmatprep.mubr.f32.mxu0 0.0
  %460 = vmatmul.mubr.f32.gmra.mxu0 %v316
  %v461 = vpop.f32.mrf.mxu0
  %v462 = vadd.f32 0.0, %v461
  %v463 = vpop.f32.mrf.mxu0
  %464 = vmatprep.mubr.f32.mxu0 0.0
  %465 = vmatmul.mubr.f32.gmra.mxu0 %v319
  %v466 = vpop.f32.mrf.mxu0
  %v467 = vadd.f32 0.0, %v466
  %v468 = vpop.f32.mrf.mxu0
  %469 = vdwg.mxu0
  %v470 = vadd.f32 %v176, %v392
  %v471 = vadd.f32 %v181, %v397
  %v472 = vadd.f32 %v186, %v402
  %v473 = vadd.f32 %v191, %v407
  %v474 = vadd.f32 %v196, %v412
  %v475 = vadd.f32 %v201, %v417
  %v476 = vadd.f32 %v206, %v422
  %v477 = vadd.f32 %v211, %v427
  %v478 = vadd.f32 %v216, %v432
  %v479 = vadd.f32 %v221, %v437
  %v480 = vadd.f32 %v226, %v442
  %v481 = vadd.f32 %v231, %v447
  %v482 = vadd.f32 %v236, %v452
  %v483 = vadd.f32 %v241, %v457
  %v484 = vadd.f32 %v246, %v462
  %v485 = vadd.f32 %v251, %v467
  %v487 = vlaneseq
  %v488 = vshrl.u32 %v487, 7
  %v489 = vsub.s32 0, %v488
  %v490 = vrot.slane %v35, %v489
  %v492 = vadd.f32 %v470, %v490
  %v493 = vadd.f32 %v471, %v490
  %v494 = vadd.f32 %v472, %v490
  %v495 = vadd.f32 %v473, %v490
  %v496 = vadd.f32 %v474, %v490
  %v497 = vadd.f32 %v475, %v490
  %v498 = vadd.f32 %v476, %v490
  %v499 = vadd.f32 %v477, %v490
  %v500 = vadd.f32 %v478, %v490
  %v501 = vadd.f32 %v479, %v490
  %v502 = vadd.f32 %v480, %v490
  %v503 = vadd.f32 %v481, %v490
  %v504 = vadd.f32 %v482, %v490
  %v505 = vadd.f32 %v483, %v490
  %v506 = vadd.f32 %v484, %v490
  %v507 = vadd.f32 %v485, %v490
  %v508 = vmax.f32 %v492, 0.0
  %v509 = vmax.f32 %v493, 0.0
  %v510 = vmax.f32 %v494, 0.0
  %v511 = vmax.f32 %v495, 0.0
  %v512 = vmax.f32 %v496, 0.0
  %v513 = vmax.f32 %v497, 0.0
  %v514 = vmax.f32 %v498, 0.0
  %v515 = vmax.f32 %v499, 0.0
  %v516 = vmax.f32 %v500, 0.0
  %v517 = vmax.f32 %v501, 0.0
  %v518 = vmax.f32 %v502, 0.0
  %v519 = vmax.f32 %v503, 0.0
  %v520 = vmax.f32 %v504, 0.0
  %v521 = vmax.f32 %v505, 0.0
  %v522 = vmax.f32 %v506, 0.0
  %v523 = vmax.f32 %v507, 0.0
  %v525 = vlaneseq
  %v526 = vshrl.u32 %v525, 7
  %v527 = vsub.s32 0, %v526
  %v528 = vrot.slane %v40, %v527
  %vm530 = vcmask 261120
  %v532 = vsel %vm530, %v508, 0
  %v535 = vsel %vm530, %v509, 0
  %v538 = vsel %vm530, %v510, 0
  %v541 = vsel %vm530, %v511, 0
  %v544 = vsel %vm530, %v512, 0
  %v547 = vsel %vm530, %v513, 0
  %v550 = vsel %vm530, %v514, 0
  %v553 = vsel %vm530, %v515, 0
  %v556 = vsel %vm530, %v516, 0
  %v559 = vsel %vm530, %v517, 0
  %v562 = vsel %vm530, %v518, 0
  %v565 = vsel %vm530, %v519, 0
  %v568 = vsel %vm530, %v520, 0
  %v571 = vsel %vm530, %v521, 0
  %v574 = vsel %vm530, %v522, 0
  %v577 = vsel %vm530, %v523, 0
  %579 = vmatprep.subr.mxu0 0.0
  %580 = vmatpush1.msra.mxu0 0.0
  %581 = vmatprep.subr.mxu0 0.0
  %582 = vmatpush1.msra.mxu0 0.0
  %583 = vmatprep.subr.mxu0 0.0
  %584 = vmatpush1.msra.mxu0 0.0
  %585 = vmatprep.subr.mxu0 0.0
  %586 = vmatpush1.msra.mxu0 0.0
  %587 = vmatprep.subr.mxu0 0.0
  %588 = vmatpush1.msra.mxu0 0.0
  %589 = vmatprep.subr.mxu0 0.0
  %590 = vmatpush1.msra.mxu0 0.0
  %591 = vmatprep.subr.mxu0 0.0
  %592 = vmatpush1.msra.mxu0 0.0
  %593 = vmatprep.subr.mxu0 0.0
  %594 = vmatpush1.msra.mxu0 0.0
  %595 = vmatprep.subr.mxu0 0.0
  %596 = vmatpush1.msra.mxu0 0.0
  %597 = vmatprep.subr.mxu0 0.0
  %598 = vmatpush1.msra.mxu0 0.0
  %599 = vmatprep.subr.mxu0 0.0
  %600 = vmatpush1.msra.mxu0 0.0
  %601 = vmatprep.subr.mxu0 0.0
  %602 = vmatpush1.msra.mxu0 0.0
  %603 = vmatprep.subr.mxu0 0.0
  %604 = vmatpush1.msra.mxu0 %v39
  %605 = vmatprep.subr.mxu0 0.0
  %606 = vmatpush1.msra.mxu0 %v38
  %607 = vmatprep.subr.mxu0 0.0
  %608 = vmatpush1.msra.mxu0 %v37
  %609 = vmatprep.subr.mxu0 0.0
  %610 = vmatpush1.msra.mxu0 %v36
  %611 = vmatprep.subr.mxu0 0.0
  %612 = vmatpush2.msra.mxu0 0.0
  %613 = vmatprep.subr.mxu0 0.0
  %614 = vmatpush2.msra.mxu0 0.0
  %615 = vmatprep.subr.mxu0 0.0
  %616 = vmatpush2.msra.mxu0 0.0
  %617 = vmatprep.subr.mxu0 0.0
  %618 = vmatpush2.msra.mxu0 0.0
  %619 = vmatprep.subr.mxu0 0.0
  %620 = vmatpush2.msra.mxu0 0.0
  %621 = vmatprep.subr.mxu0 0.0
  %622 = vmatpush2.msra.mxu0 0.0
  %623 = vmatprep.subr.mxu0 0.0
  %624 = vmatpush2.msra.mxu0 0.0
  %625 = vmatprep.subr.mxu0 0.0
  %626 = vmatpush2.msra.mxu0 0.0
  %627 = vmatprep.subr.mxu0 0.0
  %628 = vmatpush2.msra.mxu0 0.0
  %629 = vmatprep.subr.mxu0 0.0
  %630 = vmatpush2.msra.mxu0 0.0
  %631 = vmatprep.subr.mxu0 0.0
  %632 = vmatpush2.msra.mxu0 0.0
  %633 = vmatprep.subr.mxu0 0.0
  %634 = vmatpush2.msra.mxu0 0.0
  %635 = vmatprep.subr.mxu0 0.0
  %636 = vmatpush2.msra.mxu0 0.0
  %637 = vmatprep.subr.mxu0 0.0
  %638 = vmatpush2.msra.mxu0 0.0
  %639 = vmatprep.subr.mxu0 0.0
  %640 = vmatpush2.msra.mxu0 0.0
  %641 = vmatprep.subr.mxu0 0.0
  %642 = vmatpush2.msra.mxu0 0.0
  %643 = vmatprep.mubr.f32.mxu0 0.0
  %644 = vmatmul.mubr.f32.gmra.mxu0 %v532
  %v645 = vpop.f32.mrf.mxu0
  %v646 = vadd.f32 %v528, %v645
  %v647 = vpop.f32.mrf.mxu0
  %648 = vmatprep.mubr.f32.mxu0 0.0
  %649 = vmatmul.mubr.f32.gmra.mxu0 %v535
  %v650 = vpop.f32.mrf.mxu0
  %v651 = vadd.f32 %v528, %v650
  %v652 = vpop.f32.mrf.mxu0
  %653 = vmatprep.mubr.f32.mxu0 0.0
  %654 = vmatmul.mubr.f32.gmra.mxu0 %v538
  %v655 = vpop.f32.mrf.mxu0
  %v656 = vadd.f32 %v528, %v655
  %v657 = vpop.f32.mrf.mxu0
  %658 = vmatprep.mubr.f32.mxu0 0.0
  %659 = vmatmul.mubr.f32.gmra.mxu0 %v541
  %v660 = vpop.f32.mrf.mxu0
  %v661 = vadd.f32 %v528, %v660
  %v662 = vpop.f32.mrf.mxu0
  %663 = vmatprep.mubr.f32.mxu0 0.0
  %664 = vmatmul.mubr.f32.gmra.mxu0 %v544
  %v665 = vpop.f32.mrf.mxu0
  %v666 = vadd.f32 %v528, %v665
  %v667 = vpop.f32.mrf.mxu0
  %668 = vmatprep.mubr.f32.mxu0 0.0
  %669 = vmatmul.mubr.f32.gmra.mxu0 %v547
  %v670 = vpop.f32.mrf.mxu0
  %v671 = vadd.f32 %v528, %v670
  %v672 = vpop.f32.mrf.mxu0
  %673 = vmatprep.mubr.f32.mxu0 0.0
  %674 = vmatmul.mubr.f32.gmra.mxu0 %v550
  %v675 = vpop.f32.mrf.mxu0
  %v676 = vadd.f32 %v528, %v675
  %v677 = vpop.f32.mrf.mxu0
  %678 = vmatprep.mubr.f32.mxu0 0.0
  %679 = vmatmul.mubr.f32.gmra.mxu0 %v553
  %v680 = vpop.f32.mrf.mxu0
  %v681 = vadd.f32 %v528, %v680
  %v682 = vpop.f32.mrf.mxu0
  %683 = vmatprep.mubr.f32.mxu0 0.0
  %684 = vmatmul.mubr.f32.gmra.mxu0 %v556
  %v685 = vpop.f32.mrf.mxu0
  %v686 = vadd.f32 %v528, %v685
  %v687 = vpop.f32.mrf.mxu0
  %688 = vmatprep.mubr.f32.mxu0 0.0
  %689 = vmatmul.mubr.f32.gmra.mxu0 %v559
  %v690 = vpop.f32.mrf.mxu0
  %v691 = vadd.f32 %v528, %v690
  %v692 = vpop.f32.mrf.mxu0
  %693 = vmatprep.mubr.f32.mxu0 0.0
  %694 = vmatmul.mubr.f32.gmra.mxu0 %v562
  %v695 = vpop.f32.mrf.mxu0
  %v696 = vadd.f32 %v528, %v695
  %v697 = vpop.f32.mrf.mxu0
  %698 = vmatprep.mubr.f32.mxu0 0.0
  %699 = vmatmul.mubr.f32.gmra.mxu0 %v565
  %v700 = vpop.f32.mrf.mxu0
  %v701 = vadd.f32 %v528, %v700
  %v702 = vpop.f32.mrf.mxu0
  %703 = vmatprep.mubr.f32.mxu0 0.0
  %704 = vmatmul.mubr.f32.gmra.mxu0 %v568
  %v705 = vpop.f32.mrf.mxu0
  %v706 = vadd.f32 %v528, %v705
  %v707 = vpop.f32.mrf.mxu0
  %708 = vmatprep.mubr.f32.mxu0 0.0
  %709 = vmatmul.mubr.f32.gmra.mxu0 %v571
  %v710 = vpop.f32.mrf.mxu0
  %v711 = vadd.f32 %v528, %v710
  %v712 = vpop.f32.mrf.mxu0
  %713 = vmatprep.mubr.f32.mxu0 0.0
  %714 = vmatmul.mubr.f32.gmra.mxu0 %v574
  %v715 = vpop.f32.mrf.mxu0
  %v716 = vadd.f32 %v528, %v715
  %v717 = vpop.f32.mrf.mxu0
  %718 = vmatprep.mubr.f32.mxu0 0.0
  %719 = vmatmul.mubr.f32.gmra.mxu0 %v577
  %v720 = vpop.f32.mrf.mxu0
  %v721 = vadd.f32 %v528, %v720
  %v722 = vpop.f32.mrf.mxu0
  %723 = vdwg.mxu0
  %v724 = vmax.f32 %v646, 0.0
  %v725 = vmax.f32 %v651, 0.0
  %v726 = vmax.f32 %v656, 0.0
  %v727 = vmax.f32 %v661, 0.0
  %v728 = vmax.f32 %v666, 0.0
  %v729 = vmax.f32 %v671, 0.0
  %v730 = vmax.f32 %v676, 0.0
  %v731 = vmax.f32 %v681, 0.0
  %v732 = vmax.f32 %v686, 0.0
  %v733 = vmax.f32 %v691, 0.0
  %v734 = vmax.f32 %v696, 0.0
  %v735 = vmax.f32 %v701, 0.0
  %v736 = vmax.f32 %v706, 0.0
  %v737 = vmax.f32 %v711, 0.0
  %v738 = vmax.f32 %v716, 0.0
  %v739 = vmax.f32 %v721, 0.0
  %v741 = vlaneseq
  %v742 = vshrl.u32 %v741, 7
  %v743 = vsub.s32 0, %v742
  %v744 = vrot.slane %v41, %v743
  %v746 = vmul.f32 %v724, %v744
  %v747 = vmul.f32 %v725, %v744
  %v748 = vmul.f32 %v726, %v744
  %v749 = vmul.f32 %v727, %v744
  %v750 = vmul.f32 %v728, %v744
  %v751 = vmul.f32 %v729, %v744
  %v752 = vmul.f32 %v730, %v744
  %v753 = vmul.f32 %v731, %v744
  %v754 = vmul.f32 %v732, %v744
  %v755 = vmul.f32 %v733, %v744
  %v756 = vmul.f32 %v734, %v744
  %v757 = vmul.f32 %v735, %v744
  %v758 = vmul.f32 %v736, %v744
  %v759 = vmul.f32 %v737, %v744
  %v760 = vmul.f32 %v738, %v744
  %v761 = vmul.f32 %v739, %v744
  %v762 = vsel %vm530, %v746, 0.0
  %763 = vadd.xlane.f32.xlu0 %v762
  %v764 = vpop.xlane.xlu0 %763
  %v765 = vsel %vm530, %v747, 0.0
  %766 = vadd.xlane.f32.xlu0 %v765
  %v767 = vpop.xlane.xlu0 %766
  %v768 = vsel %vm530, %v748, 0.0
  %769 = vadd.xlane.f32.xlu0 %v768
  %v770 = vpop.xlane.xlu0 %769
  %v771 = vsel %vm530, %v749, 0.0
  %772 = vadd.xlane.f32.xlu0 %v771
  %v773 = vpop.xlane.xlu0 %772
  %v774 = vsel %vm530, %v750, 0.0
  %775 = vadd.xlane.f32.xlu0 %v774
  %v776 = vpop.xlane.xlu0 %775
  %v777 = vsel %vm530, %v751, 0.0
  %778 = vadd.xlane.f32.xlu0 %v777
  %v779 = vpop.xlane.xlu0 %778
  %v780 = vsel %vm530, %v752, 0.0
  %781 = vadd.xlane.f32.xlu0 %v780
  %v782 = vpop.xlane.xlu0 %781
  %v783 = vsel %vm530, %v753, 0.0
  %784 = vadd.xlane.f32.xlu0 %v783
  %v785 = vpop.xlane.xlu0 %784
  %v786 = vsel %vm530, %v754, 0.0
  %787 = vadd.xlane.f32.xlu0 %v786
  %v788 = vpop.xlane.xlu0 %787
  %v789 = vsel %vm530, %v755, 0.0
  %790 = vadd.xlane.f32.xlu0 %v789
  %v791 = vpop.xlane.xlu0 %790
  %v792 = vsel %vm530, %v756, 0.0
  %793 = vadd.xlane.f32.xlu0 %v792
  %v794 = vpop.xlane.xlu0 %793
  %v795 = vsel %vm530, %v757, 0.0
  %796 = vadd.xlane.f32.xlu0 %v795
  %v797 = vpop.xlane.xlu0 %796
  %v798 = vsel %vm530, %v758, 0.0
  %799 = vadd.xlane.f32.xlu0 %v798
  %v800 = vpop.xlane.xlu0 %799
  %v801 = vsel %vm530, %v759, 0.0
  %802 = vadd.xlane.f32.xlu0 %v801
  %v803 = vpop.xlane.xlu0 %802
  %v804 = vsel %vm530, %v760, 0.0
  %805 = vadd.xlane.f32.xlu0 %v804
  %v806 = vpop.xlane.xlu0 %805
  %v807 = vsel %vm530, %v761, 0.0
  %808 = vadd.xlane.f32.xlu0 %v807
  %v809 = vpop.xlane.xlu0 %808
  %v811 = vlaneseq
  %v812 = vshrl.u32 %v811, 7
  %v813 = vsub.s32 0, %v812
  %v814 = vrot.slane %v42, %v813
  %v816 = vadd.f32 %v764, %v814
  %v817 = vadd.f32 %v767, %v814
  %v818 = vadd.f32 %v770, %v814
  %v819 = vadd.f32 %v773, %v814
  %v820 = vadd.f32 %v776, %v814
  %v821 = vadd.f32 %v779, %v814
  %v822 = vadd.f32 %v782, %v814
  %v823 = vadd.f32 %v785, %v814
  %v824 = vadd.f32 %v788, %v814
  %v825 = vadd.f32 %v791, %v814
  %v826 = vadd.f32 %v794, %v814
  %v827 = vadd.f32 %v797, %v814
  %v828 = vadd.f32 %v800, %v814
  %v829 = vadd.f32 %v803, %v814
  %v830 = vadd.f32 %v806, %v814
  %v831 = vadd.f32 %v809, %v814
  %vm832 = vcmp.eq.s32.totalorder %v255, 0
  %834 = vset.pattern.permute.xlu0 0
  %835 = vperm.xlu0 %834, %v816
  %v836 = vpop.permute.xlu0 %835
  %839 = vset.pattern.permute.xlu0 0
  %840 = vperm.xlu0 %839, %v817
  %v841 = vpop.permute.xlu0 %840
  %844 = vset.pattern.permute.xlu0 0
  %845 = vperm.xlu0 %844, %v818
  %v846 = vpop.permute.xlu0 %845
  %849 = vset.pattern.permute.xlu0 0
  %850 = vperm.xlu0 %849, %v819
  %v851 = vpop.permute.xlu0 %850
  %854 = vset.pattern.permute.xlu0 0
  %855 = vperm.xlu0 %854, %v820
  %v856 = vpop.permute.xlu0 %855
  %859 = vset.pattern.permute.xlu0 0
  %860 = vperm.xlu0 %859, %v821
  %v861 = vpop.permute.xlu0 %860
  %864 = vset.pattern.permute.xlu0 0
  %865 = vperm.xlu0 %864, %v822
  %v866 = vpop.permute.xlu0 %865
  %869 = vset.pattern.permute.xlu0 0
  %870 = vperm.xlu0 %869, %v823
  %v871 = vpop.permute.xlu0 %870
  %874 = vset.pattern.permute.xlu0 0
  %875 = vperm.xlu0 %874, %v824
  %v876 = vpop.permute.xlu0 %875
  %879 = vset.pattern.permute.xlu0 0
  %880 = vperm.xlu0 %879, %v825
  %v881 = vpop.permute.xlu0 %880
  %884 = vset.pattern.permute.xlu0 0
  %885 = vperm.xlu0 %884, %v826
  %v886 = vpop.permute.xlu0 %885
  %889 = vset.pattern.permute.xlu0 0
  %890 = vperm.xlu0 %889, %v827
  %v891 = vpop.permute.xlu0 %890
  %894 = vset.pattern.permute.xlu0 0
  %895 = vperm.xlu0 %894, %v828
  %v896 = vpop.permute.xlu0 %895
  %899 = vset.pattern.permute.xlu0 0
  %900 = vperm.xlu0 %899, %v829
  %v901 = vpop.permute.xlu0 %900
  %904 = vset.pattern.permute.xlu0 0
  %905 = vperm.xlu0 %904, %v830
  %v906 = vpop.permute.xlu0 %905
  %909 = vset.pattern.permute.xlu0 0
  %910 = vperm.xlu0 %909, %v831
  %v911 = vpop.permute.xlu0 %910
  %v913 = vsel %vm832, %v836, 0.0
  %v914 = vsel %vm832, %v841, 0.0
  %v915 = vsel %vm832, %v846, 0.0
  %v916 = vsel %vm832, %v851, 0.0
  %v917 = vsel %vm832, %v856, 0.0
  %v918 = vsel %vm832, %v861, 0.0
  %v919 = vsel %vm832, %v866, 0.0
  %v920 = vsel %vm832, %v871, 0.0
  %v921 = vsel %vm832, %v876, 0.0
  %v922 = vsel %vm832, %v881, 0.0
  %v923 = vsel %vm832, %v886, 0.0
  %v924 = vsel %vm832, %v891, 0.0
  %v925 = vsel %vm832, %v896, 0.0
  %v926 = vsel %vm832, %v901, 0.0
  %v927 = vsel %vm832, %v906, 0.0
  %v928 = vsel %vm832, %v911, 0.0
  %929 = vrot.lane.b32.xlu0 %v256, 124
  %v930 = vpop.permute.xlu0 %929
  %931 = vrot.lane.b32.xlu0 %v257, 124
  %v932 = vpop.permute.xlu0 %931
  %933 = vrot.lane.b32.xlu0 %v258, 124
  %v934 = vpop.permute.xlu0 %933
  %935 = vrot.lane.b32.xlu0 %v259, 124
  %v936 = vpop.permute.xlu0 %935
  %937 = vrot.lane.b32.xlu0 %v260, 124
  %v938 = vpop.permute.xlu0 %937
  %939 = vrot.lane.b32.xlu0 %v261, 124
  %v940 = vpop.permute.xlu0 %939
  %941 = vrot.lane.b32.xlu0 %v262, 124
  %v942 = vpop.permute.xlu0 %941
  %943 = vrot.lane.b32.xlu0 %v263, 124
  %v944 = vpop.permute.xlu0 %943
  %945 = vrot.lane.b32.xlu0 %v264, 124
  %v946 = vpop.permute.xlu0 %945
  %947 = vrot.lane.b32.xlu0 %v265, 124
  %v948 = vpop.permute.xlu0 %947
  %949 = vrot.lane.b32.xlu0 %v266, 124
  %v950 = vpop.permute.xlu0 %949
  %951 = vrot.lane.b32.xlu0 %v267, 124
  %v952 = vpop.permute.xlu0 %951
  %953 = vrot.lane.b32.xlu0 %v268, 124
  %v954 = vpop.permute.xlu0 %953
  %955 = vrot.lane.b32.xlu0 %v269, 124
  %v956 = vpop.permute.xlu0 %955
  %957 = vrot.lane.b32.xlu0 %v270, 124
  %v958 = vpop.permute.xlu0 %957
  %959 = vrot.lane.b32.xlu0 %v271, 124
  %v960 = vpop.permute.xlu0 %959
  %v961 = vsel %vm272, %v930, 0
  %v963 = vsel %vm272, %v932, 0
  %v965 = vsel %vm272, %v934, 0
  %v967 = vsel %vm272, %v936, 0
  %v969 = vsel %vm272, %v938, 0
  %v971 = vsel %vm272, %v940, 0
  %v973 = vsel %vm272, %v942, 0
  %v975 = vsel %vm272, %v944, 0
  %v977 = vsel %vm272, %v946, 0
  %v979 = vsel %vm272, %v948, 0
  %v981 = vsel %vm272, %v950, 0
  %v983 = vsel %vm272, %v952, 0
  %v985 = vsel %vm272, %v954, 0
  %v987 = vsel %vm272, %v956, 0
  %v989 = vsel %vm272, %v958, 0
  %v991 = vsel %vm272, %v960, 0
  %993 = vmatprep.subr.mxu0 0.0
  %994 = vmatpush1.msra.mxu0 0.0
  %995 = vmatprep.subr.mxu0 0.0
  %996 = vmatpush1.msra.mxu0 0.0
  %997 = vmatprep.subr.mxu0 0.0
  %998 = vmatpush1.msra.mxu0 0.0
  %999 = vmatprep.subr.mxu0 0.0
  %1000 = vmatpush1.msra.mxu0 0.0
  %1001 = vmatprep.subr.mxu0 0.0
  %1002 = vmatpush1.msra.mxu0 0.0
  %1003 = vmatprep.subr.mxu0 0.0
  %1004 = vmatpush1.msra.mxu0 0.0
  %1005 = vmatprep.subr.mxu0 0.0
  %1006 = vmatpush1.msra.mxu0 0.0
  %1007 = vmatprep.subr.mxu0 0.0
  %1008 = vmatpush1.msra.mxu0 0.0
  %1009 = vmatprep.subr.mxu0 0.0
  %1010 = vmatpush1.msra.mxu0 0.0
  %1011 = vmatprep.subr.mxu0 0.0
  %1012 = vmatpush1.msra.mxu0 0.0
  %1013 = vmatprep.subr.mxu0 0.0
  %1014 = vmatpush1.msra.mxu0 0.0
  %1015 = vmatprep.subr.mxu0 0.0
  %1016 = vmatpush1.msra.mxu0 0.0
  %1017 = vmatprep.subr.mxu0 0.0
  %1018 = vmatpush1.msra.mxu0 0.0
  %1019 = vmatprep.subr.mxu0 0.0
  %1020 = vmatpush1.msra.mxu0 0.0
  %1021 = vmatprep.subr.mxu0 0.0
  %1022 = vmatpush1.msra.mxu0 0.0
  %1023 = vmatprep.subr.mxu0 0.0
  %1024 = vmatpush1.msra.mxu0 %v323
  %1025 = vmatprep.subr.mxu0 0.0
  %1026 = vmatpush2.msra.mxu0 0.0
  %1027 = vmatprep.subr.mxu0 0.0
  %1028 = vmatpush2.msra.mxu0 0.0
  %1029 = vmatprep.subr.mxu0 0.0
  %1030 = vmatpush2.msra.mxu0 0.0
  %1031 = vmatprep.subr.mxu0 0.0
  %1032 = vmatpush2.msra.mxu0 0.0
  %1033 = vmatprep.subr.mxu0 0.0
  %1034 = vmatpush2.msra.mxu0 0.0
  %1035 = vmatprep.subr.mxu0 0.0
  %1036 = vmatpush2.msra.mxu0 0.0
  %1037 = vmatprep.subr.mxu0 0.0
  %1038 = vmatpush2.msra.mxu0 0.0
  %1039 = vmatprep.subr.mxu0 0.0
  %1040 = vmatpush2.msra.mxu0 0.0
  %1041 = vmatprep.subr.mxu0 0.0
  %1042 = vmatpush2.msra.mxu0 0.0
  %1043 = vmatprep.subr.mxu0 0.0
  %1044 = vmatpush2.msra.mxu0 0.0
  %1045 = vmatprep.subr.mxu0 0.0
  %1046 = vmatpush2.msra.mxu0 0.0
  %1047 = vmatprep.subr.mxu0 0.0
  %1048 = vmatpush2.msra.mxu0 0.0
  %1049 = vmatprep.subr.mxu0 0.0
  %1050 = vmatpush2.msra.mxu0 0.0
  %1051 = vmatprep.subr.mxu0 0.0
  %1052 = vmatpush2.msra.mxu0 0.0
  %1053 = vmatprep.subr.mxu0 0.0
  %1054 = vmatpush2.msra.mxu0 0.0
  %1055 = vmatprep.subr.mxu0 0.0
  %1056 = vmatpush2.msra.mxu0 0.0
  %1057 = vmatprep.mubr.f32.mxu0 0.0
  %1058 = vmatmul.mubr.f32.gmra.mxu0 %v961
  %v1059 = vpop.f32.mrf.mxu0
  %v1060 = vadd.f32 0.0, %v1059
  %v1061 = vpop.f32.mrf.mxu0
  %1062 = vmatprep.mubr.f32.mxu0 0.0
  %1063 = vmatmul.mubr.f32.gmra.mxu0 %v963
  %v1064 = vpop.f32.mrf.mxu0
  %v1065 = vadd.f32 0.0, %v1064
  %v1066 = vpop.f32.mrf.mxu0
  %1067 = vmatprep.mubr.f32.mxu0 0.0
  %1068 = vmatmul.mubr.f32.gmra.mxu0 %v965
  %v1069 = vpop.f32.mrf.mxu0
  %v1070 = vadd.f32 0.0, %v1069
  %v1071 = vpop.f32.mrf.mxu0
  %1072 = vmatprep.mubr.f32.mxu0 0.0
  %1073 = vmatmul.mubr.f32.gmra.mxu0 %v967
  %v1074 = vpop.f32.mrf.mxu0
  %v1075 = vadd.f32 0.0, %v1074
  %v1076 = vpop.f32.mrf.mxu0
  %1077 = vmatprep.mubr.f32.mxu0 0.0
  %1078 = vmatmul.mubr.f32.gmra.mxu0 %v969
  %v1079 = vpop.f32.mrf.mxu0
  %v1080 = vadd.f32 0.0, %v1079
  %v1081 = vpop.f32.mrf.mxu0
  %1082 = vmatprep.mubr.f32.mxu0 0.0
  %1083 = vmatmul.mubr.f32.gmra.mxu0 %v971
  %v1084 = vpop.f32.mrf.mxu0
  %v1085 = vadd.f32 0.0, %v1084
  %v1086 = vpop.f32.mrf.mxu0
  %1087 = vmatprep.mubr.f32.mxu0 0.0
  %1088 = vmatmul.mubr.f32.gmra.mxu0 %v973
  %v1089 = vpop.f32.mrf.mxu0
  %v1090 = vadd.f32 0.0, %v1089
  %v1091 = vpop.f32.mrf.mxu0
  %1092 = vmatprep.mubr.f32.mxu0 0.0
  %1093 = vmatmul.mubr.f32.gmra.mxu0 %v975
  %v1094 = vpop.f32.mrf.mxu0
  %v1095 = vadd.f32 0.0, %v1094
  %v1096 = vpop.f32.mrf.mxu0
  %1097 = vmatprep.mubr.f32.mxu0 0.0
  %1098 = vmatmul.mubr.f32.gmra.mxu0 %v977
  %v1099 = vpop.f32.mrf.mxu0
  %v1100 = vadd.f32 0.0, %v1099
  %v1101 = vpop.f32.mrf.mxu0
  %1102 = vmatprep.mubr.f32.mxu0 0.0
  %1103 = vmatmul.mubr.f32.gmra.mxu0 %v979
  %v1104 = vpop.f32.mrf.mxu0
  %v1105 = vadd.f32 0.0, %v1104
  %v1106 = vpop.f32.mrf.mxu0
  %1107 = vmatprep.mubr.f32.mxu0 0.0
  %1108 = vmatmul.mubr.f32.gmra.mxu0 %v981
  %v1109 = vpop.f32.mrf.mxu0
  %v1110 = vadd.f32 0.0, %v1109
  %v1111 = vpop.f32.mrf.mxu0
  %1112 = vmatprep.mubr.f32.mxu0 0.0
  %1113 = vmatmul.mubr.f32.gmra.mxu0 %v983
  %v1114 = vpop.f32.mrf.mxu0
  %v1115 = vadd.f32 0.0, %v1114
  %v1116 = vpop.f32.mrf.mxu0
  %1117 = vmatprep.mubr.f32.mxu0 0.0
  %1118 = vmatmul.mubr.f32.gmra.mxu0 %v985
  %v1119 = vpop.f32.mrf.mxu0
  %v1120 = vadd.f32 0.0, %v1119
  %v1121 = vpop.f32.mrf.mxu0
  %1122 = vmatprep.mubr.f32.mxu0 0.0
  %1123 = vmatmul.mubr.f32.gmra.mxu0 %v987
  %v1124 = vpop.f32.mrf.mxu0
  %v1125 = vadd.f32 0.0, %v1124
  %v1126 = vpop.f32.mrf.mxu0
  %1127 = vmatprep.mubr.f32.mxu0 0.0
  %1128 = vmatmul.mubr.f32.gmra.mxu0 %v989
  %v1129 = vpop.f32.mrf.mxu0
  %v1130 = vadd.f32 0.0, %v1129
  %v1131 = vpop.f32.mrf.mxu0
  %1132 = vmatprep.mubr.f32.mxu0 0.0
  %1133 = vmatmul.mubr.f32.gmra.mxu0 %v991
  %v1134 = vpop.f32.mrf.mxu0
  %v1135 = vadd.f32 0.0, %v1134
  %v1136 = vpop.f32.mrf.mxu0
  %1137 = vdwg.mxu0
  %v1138 = vadd.f32 %v176, %v1060
  %v1139 = vadd.f32 %v181, %v1065
  %v1140 = vadd.f32 %v186, %v1070
  %v1141 = vadd.f32 %v191, %v1075
  %v1142 = vadd.f32 %v196, %v1080
  %v1143 = vadd.f32 %v201, %v1085
  %v1144 = vadd.f32 %v206, %v1090
  %v1145 = vadd.f32 %v211, %v1095
  %v1146 = vadd.f32 %v216, %v1100
  %v1147 = vadd.f32 %v221, %v1105
  %v1148 = vadd.f32 %v226, %v1110
  %v1149 = vadd.f32 %v231, %v1115
  %v1150 = vadd.f32 %v236, %v1120
  %v1151 = vadd.f32 %v241, %v1125
  %v1152 = vadd.f32 %v246, %v1130
  %v1153 = vadd.f32 %v251, %v1135
  %v1154 = vadd.f32 %v1138, %v490
  %v1155 = vadd.f32 %v1139, %v490
  %v1156 = vadd.f32 %v1140, %v490
  %v1157 = vadd.f32 %v1141, %v490
  %v1158 = vadd.f32 %v1142, %v490
  %v1159 = vadd.f32 %v1143, %v490
  %v1160 = vadd.f32 %v1144, %v490
  %v1161 = vadd.f32 %v1145, %v490
  %v1162 = vadd.f32 %v1146, %v490
  %v1163 = vadd.f32 %v1147, %v490
  %v1164 = vadd.f32 %v1148, %v490
  %v1165 = vadd.f32 %v1149, %v490
  %v1166 = vadd.f32 %v1150, %v490
  %v1167 = vadd.f32 %v1151, %v490
  %v1168 = vadd.f32 %v1152, %v490
  %v1169 = vadd.f32 %v1153, %v490
  %v1170 = vmax.f32 %v1154, 0.0
  %v1171 = vmax.f32 %v1155, 0.0
  %v1172 = vmax.f32 %v1156, 0.0
  %v1173 = vmax.f32 %v1157, 0.0
  %v1174 = vmax.f32 %v1158, 0.0
  %v1175 = vmax.f32 %v1159, 0.0
  %v1176 = vmax.f32 %v1160, 0.0
  %v1177 = vmax.f32 %v1161, 0.0
  %v1178 = vmax.f32 %v1162, 0.0
  %v1179 = vmax.f32 %v1163, 0.0
  %v1180 = vmax.f32 %v1164, 0.0
  %v1181 = vmax.f32 %v1165, 0.0
  %v1182 = vmax.f32 %v1166, 0.0
  %v1183 = vmax.f32 %v1167, 0.0
  %v1184 = vmax.f32 %v1168, 0.0
  %v1185 = vmax.f32 %v1169, 0.0
  %v1187 = vsel %vm530, %v1170, 0
  %v1190 = vsel %vm530, %v1171, 0
  %v1193 = vsel %vm530, %v1172, 0
  %v1196 = vsel %vm530, %v1173, 0
  %v1199 = vsel %vm530, %v1174, 0
  %v1202 = vsel %vm530, %v1175, 0
  %v1205 = vsel %vm530, %v1176, 0
  %v1208 = vsel %vm530, %v1177, 0
  %v1211 = vsel %vm530, %v1178, 0
  %v1214 = vsel %vm530, %v1179, 0
  %v1217 = vsel %vm530, %v1180, 0
  %v1220 = vsel %vm530, %v1181, 0
  %v1223 = vsel %vm530, %v1182, 0
  %v1226 = vsel %vm530, %v1183, 0
  %v1229 = vsel %vm530, %v1184, 0
  %v1232 = vsel %vm530, %v1185, 0
  %1234 = vmatprep.subr.mxu0 0.0
  %1235 = vmatpush1.msra.mxu0 0.0
  %1236 = vmatprep.subr.mxu0 0.0
  %1237 = vmatpush1.msra.mxu0 0.0
  %1238 = vmatprep.subr.mxu0 0.0
  %1239 = vmatpush1.msra.mxu0 0.0
  %1240 = vmatprep.subr.mxu0 0.0
  %1241 = vmatpush1.msra.mxu0 0.0
  %1242 = vmatprep.subr.mxu0 0.0
  %1243 = vmatpush1.msra.mxu0 0.0
  %1244 = vmatprep.subr.mxu0 0.0
  %1245 = vmatpush1.msra.mxu0 0.0
  %1246 = vmatprep.subr.mxu0 0.0
  %1247 = vmatpush1.msra.mxu0 0.0
  %1248 = vmatprep.subr.mxu0 0.0
  %1249 = vmatpush1.msra.mxu0 0.0
  %1250 = vmatprep.subr.mxu0 0.0
  %1251 = vmatpush1.msra.mxu0 0.0
  %1252 = vmatprep.subr.mxu0 0.0
  %1253 = vmatpush1.msra.mxu0 0.0
  %1254 = vmatprep.subr.mxu0 0.0
  %1255 = vmatpush1.msra.mxu0 0.0
  %1256 = vmatprep.subr.mxu0 0.0
  %1257 = vmatpush1.msra.mxu0 0.0
  %1258 = vmatprep.subr.mxu0 0.0
  %1259 = vmatpush1.msra.mxu0 %v39
  %1260 = vmatprep.subr.mxu0 0.0
  %1261 = vmatpush1.msra.mxu0 %v38
  %1262 = vmatprep.subr.mxu0 0.0
  %1263 = vmatpush1.msra.mxu0 %v37
  %1264 = vmatprep.subr.mxu0 0.0
  %1265 = vmatpush1.msra.mxu0 %v36
  %1266 = vmatprep.subr.mxu0 0.0
  %1267 = vmatpush2.msra.mxu0 0.0
  %1268 = vmatprep.subr.mxu0 0.0
  %1269 = vmatpush2.msra.mxu0 0.0
  %1270 = vmatprep.subr.mxu0 0.0
  %1271 = vmatpush2.msra.mxu0 0.0
  %1272 = vmatprep.subr.mxu0 0.0
  %1273 = vmatpush2.msra.mxu0 0.0
  %1274 = vmatprep.subr.mxu0 0.0
  %1275 = vmatpush2.msra.mxu0 0.0
  %1276 = vmatprep.subr.mxu0 0.0
  %1277 = vmatpush2.msra.mxu0 0.0
  %1278 = vmatprep.subr.mxu0 0.0
  %1279 = vmatpush2.msra.mxu0 0.0
  %1280 = vmatprep.subr.mxu0 0.0
  %1281 = vmatpush2.msra.mxu0 0.0
  %1282 = vmatprep.subr.mxu0 0.0
  %1283 = vmatpush2.msra.mxu0 0.0
  %1284 = vmatprep.subr.mxu0 0.0
  %1285 = vmatpush2.msra.mxu0 0.0
  %1286 = vmatprep.subr.mxu0 0.0
  %1287 = vmatpush2.msra.mxu0 0.0
  %1288 = vmatprep.subr.mxu0 0.0
  %1289 = vmatpush2.msra.mxu0 0.0
  %1290 = vmatprep.subr.mxu0 0.0
  %1291 = vmatpush2.msra.mxu0 0.0
  %1292 = vmatprep.subr.mxu0 0.0
  %1293 = vmatpush2.msra.mxu0 0.0
  %1294 = vmatprep.subr.mxu0 0.0
  %1295 = vmatpush2.msra.mxu0 0.0
  %1296 = vmatprep.subr.mxu0 0.0
  %1297 = vmatpush2.msra.mxu0 0.0
  %1298 = vmatprep.mubr.f32.mxu0 0.0
  %1299 = vmatmul.mubr.f32.gmra.mxu0 %v1187
  %v1300 = vpop.f32.mrf.mxu0
  %v1301 = vadd.f32 %v528, %v1300
  %v1302 = vpop.f32.mrf.mxu0
  %1303 = vmatprep.mubr.f32.mxu0 0.0
  %1304 = vmatmul.mubr.f32.gmra.mxu0 %v1190
  %v1305 = vpop.f32.mrf.mxu0
  %v1306 = vadd.f32 %v528, %v1305
  %v1307 = vpop.f32.mrf.mxu0
  %1308 = vmatprep.mubr.f32.mxu0 0.0
  %1309 = vmatmul.mubr.f32.gmra.mxu0 %v1193
  %v1310 = vpop.f32.mrf.mxu0
  %v1311 = vadd.f32 %v528, %v1310
  %v1312 = vpop.f32.mrf.mxu0
  %1313 = vmatprep.mubr.f32.mxu0 0.0
  %1314 = vmatmul.mubr.f32.gmra.mxu0 %v1196
  %v1315 = vpop.f32.mrf.mxu0
  %v1316 = vadd.f32 %v528, %v1315
  %v1317 = vpop.f32.mrf.mxu0
  %1318 = vmatprep.mubr.f32.mxu0 0.0
  %1319 = vmatmul.mubr.f32.gmra.mxu0 %v1199
  %v1320 = vpop.f32.mrf.mxu0
  %v1321 = vadd.f32 %v528, %v1320
  %v1322 = vpop.f32.mrf.mxu0
  %1323 = vmatprep.mubr.f32.mxu0 0.0
  %1324 = vmatmul.mubr.f32.gmra.mxu0 %v1202
  %v1325 = vpop.f32.mrf.mxu0
  %v1326 = vadd.f32 %v528, %v1325
  %v1327 = vpop.f32.mrf.mxu0
  %1328 = vmatprep.mubr.f32.mxu0 0.0
  %1329 = vmatmul.mubr.f32.gmra.mxu0 %v1205
  %v1330 = vpop.f32.mrf.mxu0
  %v1331 = vadd.f32 %v528, %v1330
  %v1332 = vpop.f32.mrf.mxu0
  %1333 = vmatprep.mubr.f32.mxu0 0.0
  %1334 = vmatmul.mubr.f32.gmra.mxu0 %v1208
  %v1335 = vpop.f32.mrf.mxu0
  %v1336 = vadd.f32 %v528, %v1335
  %v1337 = vpop.f32.mrf.mxu0
  %1338 = vmatprep.mubr.f32.mxu0 0.0
  %1339 = vmatmul.mubr.f32.gmra.mxu0 %v1211
  %v1340 = vpop.f32.mrf.mxu0
  %v1341 = vadd.f32 %v528, %v1340
  %v1342 = vpop.f32.mrf.mxu0
  %1343 = vmatprep.mubr.f32.mxu0 0.0
  %1344 = vmatmul.mubr.f32.gmra.mxu0 %v1214
  %v1345 = vpop.f32.mrf.mxu0
  %v1346 = vadd.f32 %v528, %v1345
  %v1347 = vpop.f32.mrf.mxu0
  %1348 = vmatprep.mubr.f32.mxu0 0.0
  %1349 = vmatmul.mubr.f32.gmra.mxu0 %v1217
  %v1350 = vpop.f32.mrf.mxu0
  %v1351 = vadd.f32 %v528, %v1350
  %v1352 = vpop.f32.mrf.mxu0
  %1353 = vmatprep.mubr.f32.mxu0 0.0
  %1354 = vmatmul.mubr.f32.gmra.mxu0 %v1220
  %v1355 = vpop.f32.mrf.mxu0
  %v1356 = vadd.f32 %v528, %v1355
  %v1357 = vpop.f32.mrf.mxu0
  %1358 = vmatprep.mubr.f32.mxu0 0.0
  %1359 = vmatmul.mubr.f32.gmra.mxu0 %v1223
  %v1360 = vpop.f32.mrf.mxu0
  %v1361 = vadd.f32 %v528, %v1360
  %v1362 = vpop.f32.mrf.mxu0
  %1363 = vmatprep.mubr.f32.mxu0 0.0
  %1364 = vmatmul.mubr.f32.gmra.mxu0 %v1226
  %v1365 = vpop.f32.mrf.mxu0
  %v1366 = vadd.f32 %v528, %v1365
  %v1367 = vpop.f32.mrf.mxu0
  %1368 = vmatprep.mubr.f32.mxu0 0.0
  %1369 = vmatmul.mubr.f32.gmra.mxu0 %v1229
  %v1370 = vpop.f32.mrf.mxu0
  %v1371 = vadd.f32 %v528, %v1370
  %v1372 = vpop.f32.mrf.mxu0
  %1373 = vmatprep.mubr.f32.mxu0 0.0
  %1374 = vmatmul.mubr.f32.gmra.mxu0 %v1232
  %v1375 = vpop.f32.mrf.mxu0
  %v1376 = vadd.f32 %v528, %v1375
  %v1377 = vpop.f32.mrf.mxu0
  %1378 = vdwg.mxu0
  %v1379 = vmax.f32 %v1301, 0.0
  %v1380 = vmax.f32 %v1306, 0.0
  %v1381 = vmax.f32 %v1311, 0.0
  %v1382 = vmax.f32 %v1316, 0.0
  %v1383 = vmax.f32 %v1321, 0.0
  %v1384 = vmax.f32 %v1326, 0.0
  %v1385 = vmax.f32 %v1331, 0.0
  %v1386 = vmax.f32 %v1336, 0.0
  %v1387 = vmax.f32 %v1341, 0.0
  %v1388 = vmax.f32 %v1346, 0.0
  %v1389 = vmax.f32 %v1351, 0.0
  %v1390 = vmax.f32 %v1356, 0.0
  %v1391 = vmax.f32 %v1361, 0.0
  %v1392 = vmax.f32 %v1366, 0.0
  %v1393 = vmax.f32 %v1371, 0.0
  %v1394 = vmax.f32 %v1376, 0.0
  %v1395 = vmul.f32 %v1379, %v744
  %v1396 = vmul.f32 %v1380, %v744
  %v1397 = vmul.f32 %v1381, %v744
  %v1398 = vmul.f32 %v1382, %v744
  %v1399 = vmul.f32 %v1383, %v744
  %v1400 = vmul.f32 %v1384, %v744
  %v1401 = vmul.f32 %v1385, %v744
  %v1402 = vmul.f32 %v1386, %v744
  %v1403 = vmul.f32 %v1387, %v744
  %v1404 = vmul.f32 %v1388, %v744
  %v1405 = vmul.f32 %v1389, %v744
  %v1406 = vmul.f32 %v1390, %v744
  %v1407 = vmul.f32 %v1391, %v744
  %v1408 = vmul.f32 %v1392, %v744
  %v1409 = vmul.f32 %v1393, %v744
  %v1410 = vmul.f32 %v1394, %v744
  %v1411 = vsel %vm530, %v1395, 0.0
  %1412 = vadd.xlane.f32.xlu0 %v1411
  %v1413 = vpop.xlane.xlu0 %1412
  %v1414 = vsel %vm530, %v1396, 0.0
  %1415 = vadd.xlane.f32.xlu0 %v1414
  %v1416 = vpop.xlane.xlu0 %1415
  %v1417 = vsel %vm530, %v1397, 0.0
  %1418 = vadd.xlane.f32.xlu0 %v1417
  %v1419 = vpop.xlane.xlu0 %1418
  %v1420 = vsel %vm530, %v1398, 0.0
  %1421 = vadd.xlane.f32.xlu0 %v1420
  %v1422 = vpop.xlane.xlu0 %1421
  %v1423 = vsel %vm530, %v1399, 0.0
  %1424 = vadd.xlane.f32.xlu0 %v1423
  %v1425 = vpop.xlane.xlu0 %1424
  %v1426 = vsel %vm530, %v1400, 0.0
  %1427 = vadd.xlane.f32.xlu0 %v1426
  %v1428 = vpop.xlane.xlu0 %1427
  %v1429 = vsel %vm530, %v1401, 0.0
  %1430 = vadd.xlane.f32.xlu0 %v1429
  %v1431 = vpop.xlane.xlu0 %1430
  %v1432 = vsel %vm530, %v1402, 0.0
  %1433 = vadd.xlane.f32.xlu0 %v1432
  %v1434 = vpop.xlane.xlu0 %1433
  %v1435 = vsel %vm530, %v1403, 0.0
  %1436 = vadd.xlane.f32.xlu0 %v1435
  %v1437 = vpop.xlane.xlu0 %1436
  %v1438 = vsel %vm530, %v1404, 0.0
  %1439 = vadd.xlane.f32.xlu0 %v1438
  %v1440 = vpop.xlane.xlu0 %1439
  %v1441 = vsel %vm530, %v1405, 0.0
  %1442 = vadd.xlane.f32.xlu0 %v1441
  %v1443 = vpop.xlane.xlu0 %1442
  %v1444 = vsel %vm530, %v1406, 0.0
  %1445 = vadd.xlane.f32.xlu0 %v1444
  %v1446 = vpop.xlane.xlu0 %1445
  %v1447 = vsel %vm530, %v1407, 0.0
  %1448 = vadd.xlane.f32.xlu0 %v1447
  %v1449 = vpop.xlane.xlu0 %1448
  %v1450 = vsel %vm530, %v1408, 0.0
  %1451 = vadd.xlane.f32.xlu0 %v1450
  %v1452 = vpop.xlane.xlu0 %1451
  %v1453 = vsel %vm530, %v1409, 0.0
  %1454 = vadd.xlane.f32.xlu0 %v1453
  %v1455 = vpop.xlane.xlu0 %1454
  %v1456 = vsel %vm530, %v1410, 0.0
  %1457 = vadd.xlane.f32.xlu0 %v1456
  %v1458 = vpop.xlane.xlu0 %1457
  %v1459 = vadd.f32 %v1413, %v814
  %v1460 = vadd.f32 %v1416, %v814
  %v1461 = vadd.f32 %v1419, %v814
  %v1462 = vadd.f32 %v1422, %v814
  %v1463 = vadd.f32 %v1425, %v814
  %v1464 = vadd.f32 %v1428, %v814
  %v1465 = vadd.f32 %v1431, %v814
  %v1466 = vadd.f32 %v1434, %v814
  %v1467 = vadd.f32 %v1437, %v814
  %v1468 = vadd.f32 %v1440, %v814
  %v1469 = vadd.f32 %v1443, %v814
  %v1470 = vadd.f32 %v1446, %v814
  %v1471 = vadd.f32 %v1449, %v814
  %v1472 = vadd.f32 %v1452, %v814
  %v1473 = vadd.f32 %v1455, %v814
  %v1474 = vadd.f32 %v1458, %v814
  %vm1475 = vcmp.eq.s32.totalorder %v255, 1
  %1477 = vset.pattern.permute.xlu0 0
  %1478 = vperm.xlu0 %1477, %v1459
  %v1479 = vpop.permute.xlu0 %1478
  %1482 = vset.pattern.permute.xlu0 0
  %1483 = vperm.xlu0 %1482, %v1460
  %v1484 = vpop.permute.xlu0 %1483
  %1487 = vset.pattern.permute.xlu0 0
  %1488 = vperm.xlu0 %1487, %v1461
  %v1489 = vpop.permute.xlu0 %1488
  %1492 = vset.pattern.permute.xlu0 0
  %1493 = vperm.xlu0 %1492, %v1462
  %v1494 = vpop.permute.xlu0 %1493
  %1497 = vset.pattern.permute.xlu0 0
  %1498 = vperm.xlu0 %1497, %v1463
  %v1499 = vpop.permute.xlu0 %1498
  %1502 = vset.pattern.permute.xlu0 0
  %1503 = vperm.xlu0 %1502, %v1464
  %v1504 = vpop.permute.xlu0 %1503
  %1507 = vset.pattern.permute.xlu0 0
  %1508 = vperm.xlu0 %1507, %v1465
  %v1509 = vpop.permute.xlu0 %1508
  %1512 = vset.pattern.permute.xlu0 0
  %1513 = vperm.xlu0 %1512, %v1466
  %v1514 = vpop.permute.xlu0 %1513
  %1517 = vset.pattern.permute.xlu0 0
  %1518 = vperm.xlu0 %1517, %v1467
  %v1519 = vpop.permute.xlu0 %1518
  %1522 = vset.pattern.permute.xlu0 0
  %1523 = vperm.xlu0 %1522, %v1468
  %v1524 = vpop.permute.xlu0 %1523
  %1527 = vset.pattern.permute.xlu0 0
  %1528 = vperm.xlu0 %1527, %v1469
  %v1529 = vpop.permute.xlu0 %1528
  %1532 = vset.pattern.permute.xlu0 0
  %1533 = vperm.xlu0 %1532, %v1470
  %v1534 = vpop.permute.xlu0 %1533
  %1537 = vset.pattern.permute.xlu0 0
  %1538 = vperm.xlu0 %1537, %v1471
  %v1539 = vpop.permute.xlu0 %1538
  %1542 = vset.pattern.permute.xlu0 0
  %1543 = vperm.xlu0 %1542, %v1472
  %v1544 = vpop.permute.xlu0 %1543
  %1547 = vset.pattern.permute.xlu0 0
  %1548 = vperm.xlu0 %1547, %v1473
  %v1549 = vpop.permute.xlu0 %1548
  %1552 = vset.pattern.permute.xlu0 0
  %1553 = vperm.xlu0 %1552, %v1474
  %v1554 = vpop.permute.xlu0 %1553
  %v1556 = vsel %vm1475, %v1479, %v913
  %v1557 = vsel %vm1475, %v1484, %v914
  %v1558 = vsel %vm1475, %v1489, %v915
  %v1559 = vsel %vm1475, %v1494, %v916
  %v1560 = vsel %vm1475, %v1499, %v917
  %v1561 = vsel %vm1475, %v1504, %v918
  %v1562 = vsel %vm1475, %v1509, %v919
  %v1563 = vsel %vm1475, %v1514, %v920
  %v1564 = vsel %vm1475, %v1519, %v921
  %v1565 = vsel %vm1475, %v1524, %v922
  %v1566 = vsel %vm1475, %v1529, %v923
  %v1567 = vsel %vm1475, %v1534, %v924
  %v1568 = vsel %vm1475, %v1539, %v925
  %v1569 = vsel %vm1475, %v1544, %v926
  %v1570 = vsel %vm1475, %v1549, %v927
  %v1571 = vsel %vm1475, %v1554, %v928
  %1572 = vrot.lane.b32.xlu0 %v256, 120
  %v1573 = vpop.permute.xlu0 %1572
  %1574 = vrot.lane.b32.xlu0 %v257, 120
  %v1575 = vpop.permute.xlu0 %1574
  %1576 = vrot.lane.b32.xlu0 %v258, 120
  %v1577 = vpop.permute.xlu0 %1576
  %1578 = vrot.lane.b32.xlu0 %v259, 120
  %v1579 = vpop.permute.xlu0 %1578
  %1580 = vrot.lane.b32.xlu0 %v260, 120
  %v1581 = vpop.permute.xlu0 %1580
  %1582 = vrot.lane.b32.xlu0 %v261, 120
  %v1583 = vpop.permute.xlu0 %1582
  %1584 = vrot.lane.b32.xlu0 %v262, 120
  %v1585 = vpop.permute.xlu0 %1584
  %1586 = vrot.lane.b32.xlu0 %v263, 120
  %v1587 = vpop.permute.xlu0 %1586
  %1588 = vrot.lane.b32.xlu0 %v264, 120
  %v1589 = vpop.permute.xlu0 %1588
  %1590 = vrot.lane.b32.xlu0 %v265, 120
  %v1591 = vpop.permute.xlu0 %1590
  %1592 = vrot.lane.b32.xlu0 %v266, 120
  %v1593 = vpop.permute.xlu0 %1592
  %1594 = vrot.lane.b32.xlu0 %v267, 120
  %v1595 = vpop.permute.xlu0 %1594
  %1596 = vrot.lane.b32.xlu0 %v268, 120
  %v1597 = vpop.permute.xlu0 %1596
  %1598 = vrot.lane.b32.xlu0 %v269, 120
  %v1599 = vpop.permute.xlu0 %1598
  %1600 = vrot.lane.b32.xlu0 %v270, 120
  %v1601 = vpop.permute.xlu0 %1600
  %1602 = vrot.lane.b32.xlu0 %v271, 120
  %v1603 = vpop.permute.xlu0 %1602
  %v1604 = vsel %vm272, %v1573, 0
  %v1606 = vsel %vm272, %v1575, 0
  %v1608 = vsel %vm272, %v1577, 0
  %v1610 = vsel %vm272, %v1579, 0
  %v1612 = vsel %vm272, %v1581, 0
  %v1614 = vsel %vm272, %v1583, 0
  %v1616 = vsel %vm272, %v1585, 0
  %v1618 = vsel %vm272, %v1587, 0
  %v1620 = vsel %vm272, %v1589, 0
  %v1622 = vsel %vm272, %v1591, 0
  %v1624 = vsel %vm272, %v1593, 0
  %v1626 = vsel %vm272, %v1595, 0
  %v1628 = vsel %vm272, %v1597, 0
  %v1630 = vsel %vm272, %v1599, 0
  %v1632 = vsel %vm272, %v1601, 0
  %v1634 = vsel %vm272, %v1603, 0
  %1636 = vmatprep.subr.mxu0 0.0
  %1637 = vmatpush1.msra.mxu0 0.0
  %1638 = vmatprep.subr.mxu0 0.0
  %1639 = vmatpush1.msra.mxu0 0.0
  %1640 = vmatprep.subr.mxu0 0.0
  %1641 = vmatpush1.msra.mxu0 0.0
  %1642 = vmatprep.subr.mxu0 0.0
  %1643 = vmatpush1.msra.mxu0 0.0
  %1644 = vmatprep.subr.mxu0 0.0
  %1645 = vmatpush1.msra.mxu0 0.0
  %1646 = vmatprep.subr.mxu0 0.0
  %1647 = vmatpush1.msra.mxu0 0.0
  %1648 = vmatprep.subr.mxu0 0.0
  %1649 = vmatpush1.msra.mxu0 0.0
  %1650 = vmatprep.subr.mxu0 0.0
  %1651 = vmatpush1.msra.mxu0 0.0
  %1652 = vmatprep.subr.mxu0 0.0
  %1653 = vmatpush1.msra.mxu0 0.0
  %1654 = vmatprep.subr.mxu0 0.0
  %1655 = vmatpush1.msra.mxu0 0.0
  %1656 = vmatprep.subr.mxu0 0.0
  %1657 = vmatpush1.msra.mxu0 0.0
  %1658 = vmatprep.subr.mxu0 0.0
  %1659 = vmatpush1.msra.mxu0 0.0
  %1660 = vmatprep.subr.mxu0 0.0
  %1661 = vmatpush1.msra.mxu0 0.0
  %1662 = vmatprep.subr.mxu0 0.0
  %1663 = vmatpush1.msra.mxu0 0.0
  %1664 = vmatprep.subr.mxu0 0.0
  %1665 = vmatpush1.msra.mxu0 0.0
  %1666 = vmatprep.subr.mxu0 0.0
  %1667 = vmatpush1.msra.mxu0 %v323
  %1668 = vmatprep.subr.mxu0 0.0
  %1669 = vmatpush2.msra.mxu0 0.0
  %1670 = vmatprep.subr.mxu0 0.0
  %1671 = vmatpush2.msra.mxu0 0.0
  %1672 = vmatprep.subr.mxu0 0.0
  %1673 = vmatpush2.msra.mxu0 0.0
  %1674 = vmatprep.subr.mxu0 0.0
  %1675 = vmatpush2.msra.mxu0 0.0
  %1676 = vmatprep.subr.mxu0 0.0
  %1677 = vmatpush2.msra.mxu0 0.0
  %1678 = vmatprep.subr.mxu0 0.0
  %1679 = vmatpush2.msra.mxu0 0.0
  %1680 = vmatprep.subr.mxu0 0.0
  %1681 = vmatpush2.msra.mxu0 0.0
  %1682 = vmatprep.subr.mxu0 0.0
  %1683 = vmatpush2.msra.mxu0 0.0
  %1684 = vmatprep.subr.mxu0 0.0
  %1685 = vmatpush2.msra.mxu0 0.0
  %1686 = vmatprep.subr.mxu0 0.0
  %1687 = vmatpush2.msra.mxu0 0.0
  %1688 = vmatprep.subr.mxu0 0.0
  %1689 = vmatpush2.msra.mxu0 0.0
  %1690 = vmatprep.subr.mxu0 0.0
  %1691 = vmatpush2.msra.mxu0 0.0
  %1692 = vmatprep.subr.mxu0 0.0
  %1693 = vmatpush2.msra.mxu0 0.0
  %1694 = vmatprep.subr.mxu0 0.0
  %1695 = vmatpush2.msra.mxu0 0.0
  %1696 = vmatprep.subr.mxu0 0.0
  %1697 = vmatpush2.msra.mxu0 0.0
  %1698 = vmatprep.subr.mxu0 0.0
  %1699 = vmatpush2.msra.mxu0 0.0
  %1700 = vmatprep.mubr.f32.mxu0 0.0
  %1701 = vmatmul.mubr.f32.gmra.mxu0 %v1604
  %v1702 = vpop.f32.mrf.mxu0
  %v1703 = vadd.f32 0.0, %v1702
  %v1704 = vpop.f32.mrf.mxu0
  %1705 = vmatprep.mubr.f32.mxu0 0.0
  %1706 = vmatmul.mubr.f32.gmra.mxu0 %v1606
  %v1707 = vpop.f32.mrf.mxu0
  %v1708 = vadd.f32 0.0, %v1707
  %v1709 = vpop.f32.mrf.mxu0
  %1710 = vmatprep.mubr.f32.mxu0 0.0
  %1711 = vmatmul.mubr.f32.gmra.mxu0 %v1608
  %v1712 = vpop.f32.mrf.mxu0
  %v1713 = vadd.f32 0.0, %v1712
  %v1714 = vpop.f32.mrf.mxu0
  %1715 = vmatprep.mubr.f32.mxu0 0.0
  %1716 = vmatmul.mubr.f32.gmra.mxu0 %v1610
  %v1717 = vpop.f32.mrf.mxu0
  %v1718 = vadd.f32 0.0, %v1717
  %v1719 = vpop.f32.mrf.mxu0
  %1720 = vmatprep.mubr.f32.mxu0 0.0
  %1721 = vmatmul.mubr.f32.gmra.mxu0 %v1612
  %v1722 = vpop.f32.mrf.mxu0
  %v1723 = vadd.f32 0.0, %v1722
  %v1724 = vpop.f32.mrf.mxu0
  %1725 = vmatprep.mubr.f32.mxu0 0.0
  %1726 = vmatmul.mubr.f32.gmra.mxu0 %v1614
  %v1727 = vpop.f32.mrf.mxu0
  %v1728 = vadd.f32 0.0, %v1727
  %v1729 = vpop.f32.mrf.mxu0
  %1730 = vmatprep.mubr.f32.mxu0 0.0
  %1731 = vmatmul.mubr.f32.gmra.mxu0 %v1616
  %v1732 = vpop.f32.mrf.mxu0
  %v1733 = vadd.f32 0.0, %v1732
  %v1734 = vpop.f32.mrf.mxu0
  %1735 = vmatprep.mubr.f32.mxu0 0.0
  %1736 = vmatmul.mubr.f32.gmra.mxu0 %v1618
  %v1737 = vpop.f32.mrf.mxu0
  %v1738 = vadd.f32 0.0, %v1737
  %v1739 = vpop.f32.mrf.mxu0
  %1740 = vmatprep.mubr.f32.mxu0 0.0
  %1741 = vmatmul.mubr.f32.gmra.mxu0 %v1620
  %v1742 = vpop.f32.mrf.mxu0
  %v1743 = vadd.f32 0.0, %v1742
  %v1744 = vpop.f32.mrf.mxu0
  %1745 = vmatprep.mubr.f32.mxu0 0.0
  %1746 = vmatmul.mubr.f32.gmra.mxu0 %v1622
  %v1747 = vpop.f32.mrf.mxu0
  %v1748 = vadd.f32 0.0, %v1747
  %v1749 = vpop.f32.mrf.mxu0
  %1750 = vmatprep.mubr.f32.mxu0 0.0
  %1751 = vmatmul.mubr.f32.gmra.mxu0 %v1624
  %v1752 = vpop.f32.mrf.mxu0
  %v1753 = vadd.f32 0.0, %v1752
  %v1754 = vpop.f32.mrf.mxu0
  %1755 = vmatprep.mubr.f32.mxu0 0.0
  %1756 = vmatmul.mubr.f32.gmra.mxu0 %v1626
  %v1757 = vpop.f32.mrf.mxu0
  %v1758 = vadd.f32 0.0, %v1757
  %v1759 = vpop.f32.mrf.mxu0
  %1760 = vmatprep.mubr.f32.mxu0 0.0
  %1761 = vmatmul.mubr.f32.gmra.mxu0 %v1628
  %v1762 = vpop.f32.mrf.mxu0
  %v1763 = vadd.f32 0.0, %v1762
  %v1764 = vpop.f32.mrf.mxu0
  %1765 = vmatprep.mubr.f32.mxu0 0.0
  %1766 = vmatmul.mubr.f32.gmra.mxu0 %v1630
  %v1767 = vpop.f32.mrf.mxu0
  %v1768 = vadd.f32 0.0, %v1767
  %v1769 = vpop.f32.mrf.mxu0
  %1770 = vmatprep.mubr.f32.mxu0 0.0
  %1771 = vmatmul.mubr.f32.gmra.mxu0 %v1632
  %v1772 = vpop.f32.mrf.mxu0
  %v1773 = vadd.f32 0.0, %v1772
  %v1774 = vpop.f32.mrf.mxu0
  %1775 = vmatprep.mubr.f32.mxu0 0.0
  %1776 = vmatmul.mubr.f32.gmra.mxu0 %v1634
  %v1777 = vpop.f32.mrf.mxu0
  %v1778 = vadd.f32 0.0, %v1777
  %v1779 = vpop.f32.mrf.mxu0
  %1780 = vdwg.mxu0
  %v1781 = vadd.f32 %v176, %v1703
  %v1782 = vadd.f32 %v181, %v1708
  %v1783 = vadd.f32 %v186, %v1713
  %v1784 = vadd.f32 %v191, %v1718
  %v1785 = vadd.f32 %v196, %v1723
  %v1786 = vadd.f32 %v201, %v1728
  %v1787 = vadd.f32 %v206, %v1733
  %v1788 = vadd.f32 %v211, %v1738
  %v1789 = vadd.f32 %v216, %v1743
  %v1790 = vadd.f32 %v221, %v1748
  %v1791 = vadd.f32 %v226, %v1753
  %v1792 = vadd.f32 %v231, %v1758
  %v1793 = vadd.f32 %v236, %v1763
  %v1794 = vadd.f32 %v241, %v1768
  %v1795 = vadd.f32 %v246, %v1773
  %v1796 = vadd.f32 %v251, %v1778
  %v1797 = vadd.f32 %v1781, %v490
  %v1798 = vadd.f32 %v1782, %v490
  %v1799 = vadd.f32 %v1783, %v490
  %v1800 = vadd.f32 %v1784, %v490
  %v1801 = vadd.f32 %v1785, %v490
  %v1802 = vadd.f32 %v1786, %v490
  %v1803 = vadd.f32 %v1787, %v490
  %v1804 = vadd.f32 %v1788, %v490
  %v1805 = vadd.f32 %v1789, %v490
  %v1806 = vadd.f32 %v1790, %v490
  %v1807 = vadd.f32 %v1791, %v490
  %v1808 = vadd.f32 %v1792, %v490
  %v1809 = vadd.f32 %v1793, %v490
  %v1810 = vadd.f32 %v1794, %v490
  %v1811 = vadd.f32 %v1795, %v490
  %v1812 = vadd.f32 %v1796, %v490
  %v1813 = vmax.f32 %v1797, 0.0
  %v1814 = vmax.f32 %v1798, 0.0
  %v1815 = vmax.f32 %v1799, 0.0
  %v1816 = vmax.f32 %v1800, 0.0
  %v1817 = vmax.f32 %v1801, 0.0
  %v1818 = vmax.f32 %v1802, 0.0
  %v1819 = vmax.f32 %v1803, 0.0
  %v1820 = vmax.f32 %v1804, 0.0
  %v1821 = vmax.f32 %v1805, 0.0
  %v1822 = vmax.f32 %v1806, 0.0
  %v1823 = vmax.f32 %v1807, 0.0
  %v1824 = vmax.f32 %v1808, 0.0
  %v1825 = vmax.f32 %v1809, 0.0
  %v1826 = vmax.f32 %v1810, 0.0
  %v1827 = vmax.f32 %v1811, 0.0
  %v1828 = vmax.f32 %v1812, 0.0
  %v1830 = vsel %vm530, %v1813, 0
  %v1833 = vsel %vm530, %v1814, 0
  %v1836 = vsel %vm530, %v1815, 0
  %v1839 = vsel %vm530, %v1816, 0
  %v1842 = vsel %vm530, %v1817, 0
  %v1845 = vsel %vm530, %v1818, 0
  %v1848 = vsel %vm530, %v1819, 0
  %v1851 = vsel %vm530, %v1820, 0
  %v1854 = vsel %vm530, %v1821, 0
  %v1857 = vsel %vm530, %v1822, 0
  %v1860 = vsel %vm530, %v1823, 0
  %v1863 = vsel %vm530, %v1824, 0
  %v1866 = vsel %vm530, %v1825, 0
  %v1869 = vsel %vm530, %v1826, 0
  %v1872 = vsel %vm530, %v1827, 0
  %v1875 = vsel %vm530, %v1828, 0
  %1877 = vmatprep.subr.mxu0 0.0
  %1878 = vmatpush1.msra.mxu0 0.0
  %1879 = vmatprep.subr.mxu0 0.0
  %1880 = vmatpush1.msra.mxu0 0.0
  %1881 = vmatprep.subr.mxu0 0.0
  %1882 = vmatpush1.msra.mxu0 0.0
  %1883 = vmatprep.subr.mxu0 0.0
  %1884 = vmatpush1.msra.mxu0 0.0
  %1885 = vmatprep.subr.mxu0 0.0
  %1886 = vmatpush1.msra.mxu0 0.0
  %1887 = vmatprep.subr.mxu0 0.0
  %1888 = vmatpush1.msra.mxu0 0.0
  %1889 = vmatprep.subr.mxu0 0.0
  %1890 = vmatpush1.msra.mxu0 0.0
  %1891 = vmatprep.subr.mxu0 0.0
  %1892 = vmatpush1.msra.mxu0 0.0
  %1893 = vmatprep.subr.mxu0 0.0
  %1894 = vmatpush1.msra.mxu0 0.0
  %1895 = vmatprep.subr.mxu0 0.0
  %1896 = vmatpush1.msra.mxu0 0.0
  %1897 = vmatprep.subr.mxu0 0.0
  %1898 = vmatpush1.msra.mxu0 0.0
  %1899 = vmatprep.subr.mxu0 0.0
  %1900 = vmatpush1.msra.mxu0 0.0
  %1901 = vmatprep.subr.mxu0 0.0
  %1902 = vmatpush1.msra.mxu0 %v39
  %1903 = vmatprep.subr.mxu0 0.0
  %1904 = vmatpush1.msra.mxu0 %v38
  %1905 = vmatprep.subr.mxu0 0.0
  %1906 = vmatpush1.msra.mxu0 %v37
  %1907 = vmatprep.subr.mxu0 0.0
  %1908 = vmatpush1.msra.mxu0 %v36
  %1909 = vmatprep.subr.mxu0 0.0
  %1910 = vmatpush2.msra.mxu0 0.0
  %1911 = vmatprep.subr.mxu0 0.0
  %1912 = vmatpush2.msra.mxu0 0.0
  %1913 = vmatprep.subr.mxu0 0.0
  %1914 = vmatpush2.msra.mxu0 0.0
  %1915 = vmatprep.subr.mxu0 0.0
  %1916 = vmatpush2.msra.mxu0 0.0
  %1917 = vmatprep.subr.mxu0 0.0
  %1918 = vmatpush2.msra.mxu0 0.0
  %1919 = vmatprep.subr.mxu0 0.0
  %1920 = vmatpush2.msra.mxu0 0.0
  %1921 = vmatprep.subr.mxu0 0.0
  %1922 = vmatpush2.msra.mxu0 0.0
  %1923 = vmatprep.subr.mxu0 0.0
  %1924 = vmatpush2.msra.mxu0 0.0
  %1925 = vmatprep.subr.mxu0 0.0
  %1926 = vmatpush2.msra.mxu0 0.0
  %1927 = vmatprep.subr.mxu0 0.0
  %1928 = vmatpush2.msra.mxu0 0.0
  %1929 = vmatprep.subr.mxu0 0.0
  %1930 = vmatpush2.msra.mxu0 0.0
  %1931 = vmatprep.subr.mxu0 0.0
  %1932 = vmatpush2.msra.mxu0 0.0
  %1933 = vmatprep.subr.mxu0 0.0
  %1934 = vmatpush2.msra.mxu0 0.0
  %1935 = vmatprep.subr.mxu0 0.0
  %1936 = vmatpush2.msra.mxu0 0.0
  %1937 = vmatprep.subr.mxu0 0.0
  %1938 = vmatpush2.msra.mxu0 0.0
  %1939 = vmatprep.subr.mxu0 0.0
  %1940 = vmatpush2.msra.mxu0 0.0
  %1941 = vmatprep.mubr.f32.mxu0 0.0
  %1942 = vmatmul.mubr.f32.gmra.mxu0 %v1830
  %v1943 = vpop.f32.mrf.mxu0
  %v1944 = vadd.f32 %v528, %v1943
  %v1945 = vpop.f32.mrf.mxu0
  %1946 = vmatprep.mubr.f32.mxu0 0.0
  %1947 = vmatmul.mubr.f32.gmra.mxu0 %v1833
  %v1948 = vpop.f32.mrf.mxu0
  %v1949 = vadd.f32 %v528, %v1948
  %v1950 = vpop.f32.mrf.mxu0
  %1951 = vmatprep.mubr.f32.mxu0 0.0
  %1952 = vmatmul.mubr.f32.gmra.mxu0 %v1836
  %v1953 = vpop.f32.mrf.mxu0
  %v1954 = vadd.f32 %v528, %v1953
  %v1955 = vpop.f32.mrf.mxu0
  %1956 = vmatprep.mubr.f32.mxu0 0.0
  %1957 = vmatmul.mubr.f32.gmra.mxu0 %v1839
  %v1958 = vpop.f32.mrf.mxu0
  %v1959 = vadd.f32 %v528, %v1958
  %v1960 = vpop.f32.mrf.mxu0
  %1961 = vmatprep.mubr.f32.mxu0 0.0
  %1962 = vmatmul.mubr.f32.gmra.mxu0 %v1842
  %v1963 = vpop.f32.mrf.mxu0
  %v1964 = vadd.f32 %v528, %v1963
  %v1965 = vpop.f32.mrf.mxu0
  %1966 = vmatprep.mubr.f32.mxu0 0.0
  %1967 = vmatmul.mubr.f32.gmra.mxu0 %v1845
  %v1968 = vpop.f32.mrf.mxu0
  %v1969 = vadd.f32 %v528, %v1968
  %v1970 = vpop.f32.mrf.mxu0
  %1971 = vmatprep.mubr.f32.mxu0 0.0
  %1972 = vmatmul.mubr.f32.gmra.mxu0 %v1848
  %v1973 = vpop.f32.mrf.mxu0
  %v1974 = vadd.f32 %v528, %v1973
  %v1975 = vpop.f32.mrf.mxu0
  %1976 = vmatprep.mubr.f32.mxu0 0.0
  %1977 = vmatmul.mubr.f32.gmra.mxu0 %v1851
  %v1978 = vpop.f32.mrf.mxu0
  %v1979 = vadd.f32 %v528, %v1978
  %v1980 = vpop.f32.mrf.mxu0
  %1981 = vmatprep.mubr.f32.mxu0 0.0
  %1982 = vmatmul.mubr.f32.gmra.mxu0 %v1854
  %v1983 = vpop.f32.mrf.mxu0
  %v1984 = vadd.f32 %v528, %v1983
  %v1985 = vpop.f32.mrf.mxu0
  %1986 = vmatprep.mubr.f32.mxu0 0.0
  %1987 = vmatmul.mubr.f32.gmra.mxu0 %v1857
  %v1988 = vpop.f32.mrf.mxu0
  %v1989 = vadd.f32 %v528, %v1988
  %v1990 = vpop.f32.mrf.mxu0
  %1991 = vmatprep.mubr.f32.mxu0 0.0
  %1992 = vmatmul.mubr.f32.gmra.mxu0 %v1860
  %v1993 = vpop.f32.mrf.mxu0
  %v1994 = vadd.f32 %v528, %v1993
  %v1995 = vpop.f32.mrf.mxu0
  %1996 = vmatprep.mubr.f32.mxu0 0.0
  %1997 = vmatmul.mubr.f32.gmra.mxu0 %v1863
  %v1998 = vpop.f32.mrf.mxu0
  %v1999 = vadd.f32 %v528, %v1998
  %v2000 = vpop.f32.mrf.mxu0
  %2001 = vmatprep.mubr.f32.mxu0 0.0
  %2002 = vmatmul.mubr.f32.gmra.mxu0 %v1866
  %v2003 = vpop.f32.mrf.mxu0
  %v2004 = vadd.f32 %v528, %v2003
  %v2005 = vpop.f32.mrf.mxu0
  %2006 = vmatprep.mubr.f32.mxu0 0.0
  %2007 = vmatmul.mubr.f32.gmra.mxu0 %v1869
  %v2008 = vpop.f32.mrf.mxu0
  %v2009 = vadd.f32 %v528, %v2008
  %v2010 = vpop.f32.mrf.mxu0
  %2011 = vmatprep.mubr.f32.mxu0 0.0
  %2012 = vmatmul.mubr.f32.gmra.mxu0 %v1872
  %v2013 = vpop.f32.mrf.mxu0
  %v2014 = vadd.f32 %v528, %v2013
  %v2015 = vpop.f32.mrf.mxu0
  %2016 = vmatprep.mubr.f32.mxu0 0.0
  %2017 = vmatmul.mubr.f32.gmra.mxu0 %v1875
  %v2018 = vpop.f32.mrf.mxu0
  %v2019 = vadd.f32 %v528, %v2018
  %v2020 = vpop.f32.mrf.mxu0
  %2021 = vdwg.mxu0
  %v2022 = vmax.f32 %v1944, 0.0
  %v2023 = vmax.f32 %v1949, 0.0
  %v2024 = vmax.f32 %v1954, 0.0
  %v2025 = vmax.f32 %v1959, 0.0
  %v2026 = vmax.f32 %v1964, 0.0
  %v2027 = vmax.f32 %v1969, 0.0
  %v2028 = vmax.f32 %v1974, 0.0
  %v2029 = vmax.f32 %v1979, 0.0
  %v2030 = vmax.f32 %v1984, 0.0
  %v2031 = vmax.f32 %v1989, 0.0
  %v2032 = vmax.f32 %v1994, 0.0
  %v2033 = vmax.f32 %v1999, 0.0
  %v2034 = vmax.f32 %v2004, 0.0
  %v2035 = vmax.f32 %v2009, 0.0
  %v2036 = vmax.f32 %v2014, 0.0
  %v2037 = vmax.f32 %v2019, 0.0
  %v2038 = vmul.f32 %v2022, %v744
  %v2039 = vmul.f32 %v2023, %v744
  %v2040 = vmul.f32 %v2024, %v744
  %v2041 = vmul.f32 %v2025, %v744
  %v2042 = vmul.f32 %v2026, %v744
  %v2043 = vmul.f32 %v2027, %v744
  %v2044 = vmul.f32 %v2028, %v744
  %v2045 = vmul.f32 %v2029, %v744
  %v2046 = vmul.f32 %v2030, %v744
  %v2047 = vmul.f32 %v2031, %v744
  %v2048 = vmul.f32 %v2032, %v744
  %v2049 = vmul.f32 %v2033, %v744
  %v2050 = vmul.f32 %v2034, %v744
  %v2051 = vmul.f32 %v2035, %v744
  %v2052 = vmul.f32 %v2036, %v744
  %v2053 = vmul.f32 %v2037, %v744
  %v2054 = vsel %vm530, %v2038, 0.0
  %2055 = vadd.xlane.f32.xlu0 %v2054
  %v2056 = vpop.xlane.xlu0 %2055
  %v2057 = vsel %vm530, %v2039, 0.0
  %2058 = vadd.xlane.f32.xlu0 %v2057
  %v2059 = vpop.xlane.xlu0 %2058
  %v2060 = vsel %vm530, %v2040, 0.0
  %2061 = vadd.xlane.f32.xlu0 %v2060
  %v2062 = vpop.xlane.xlu0 %2061
  %v2063 = vsel %vm530, %v2041, 0.0
  %2064 = vadd.xlane.f32.xlu0 %v2063
  %v2065 = vpop.xlane.xlu0 %2064
  %v2066 = vsel %vm530, %v2042, 0.0
  %2067 = vadd.xlane.f32.xlu0 %v2066
  %v2068 = vpop.xlane.xlu0 %2067
  %v2069 = vsel %vm530, %v2043, 0.0
  %2070 = vadd.xlane.f32.xlu0 %v2069
  %v2071 = vpop.xlane.xlu0 %2070
  %v2072 = vsel %vm530, %v2044, 0.0
  %2073 = vadd.xlane.f32.xlu0 %v2072
  %v2074 = vpop.xlane.xlu0 %2073
  %v2075 = vsel %vm530, %v2045, 0.0
  %2076 = vadd.xlane.f32.xlu0 %v2075
  %v2077 = vpop.xlane.xlu0 %2076
  %v2078 = vsel %vm530, %v2046, 0.0
  %2079 = vadd.xlane.f32.xlu0 %v2078
  %v2080 = vpop.xlane.xlu0 %2079
  %v2081 = vsel %vm530, %v2047, 0.0
  %2082 = vadd.xlane.f32.xlu0 %v2081
  %v2083 = vpop.xlane.xlu0 %2082
  %v2084 = vsel %vm530, %v2048, 0.0
  %2085 = vadd.xlane.f32.xlu0 %v2084
  %v2086 = vpop.xlane.xlu0 %2085
  %v2087 = vsel %vm530, %v2049, 0.0
  %2088 = vadd.xlane.f32.xlu0 %v2087
  %v2089 = vpop.xlane.xlu0 %2088
  %v2090 = vsel %vm530, %v2050, 0.0
  %2091 = vadd.xlane.f32.xlu0 %v2090
  %v2092 = vpop.xlane.xlu0 %2091
  %v2093 = vsel %vm530, %v2051, 0.0
  %2094 = vadd.xlane.f32.xlu0 %v2093
  %v2095 = vpop.xlane.xlu0 %2094
  %v2096 = vsel %vm530, %v2052, 0.0
  %2097 = vadd.xlane.f32.xlu0 %v2096
  %v2098 = vpop.xlane.xlu0 %2097
  %v2099 = vsel %vm530, %v2053, 0.0
  %2100 = vadd.xlane.f32.xlu0 %v2099
  %v2101 = vpop.xlane.xlu0 %2100
  %v2102 = vadd.f32 %v2056, %v814
  %v2103 = vadd.f32 %v2059, %v814
  %v2104 = vadd.f32 %v2062, %v814
  %v2105 = vadd.f32 %v2065, %v814
  %v2106 = vadd.f32 %v2068, %v814
  %v2107 = vadd.f32 %v2071, %v814
  %v2108 = vadd.f32 %v2074, %v814
  %v2109 = vadd.f32 %v2077, %v814
  %v2110 = vadd.f32 %v2080, %v814
  %v2111 = vadd.f32 %v2083, %v814
  %v2112 = vadd.f32 %v2086, %v814
  %v2113 = vadd.f32 %v2089, %v814
  %v2114 = vadd.f32 %v2092, %v814
  %v2115 = vadd.f32 %v2095, %v814
  %v2116 = vadd.f32 %v2098, %v814
  %v2117 = vadd.f32 %v2101, %v814
  %vm2118 = vcmp.eq.s32.totalorder %v255, 2
  %2120 = vset.pattern.permute.xlu0 0
  %2121 = vperm.xlu0 %2120, %v2102
  %v2122 = vpop.permute.xlu0 %2121
  %2125 = vset.pattern.permute.xlu0 0
  %2126 = vperm.xlu0 %2125, %v2103
  %v2127 = vpop.permute.xlu0 %2126
  %2130 = vset.pattern.permute.xlu0 0
  %2131 = vperm.xlu0 %2130, %v2104
  %v2132 = vpop.permute.xlu0 %2131
  %2135 = vset.pattern.permute.xlu0 0
  %2136 = vperm.xlu0 %2135, %v2105
  %v2137 = vpop.permute.xlu0 %2136
  %2140 = vset.pattern.permute.xlu0 0
  %2141 = vperm.xlu0 %2140, %v2106
  %v2142 = vpop.permute.xlu0 %2141
  %2145 = vset.pattern.permute.xlu0 0
  %2146 = vperm.xlu0 %2145, %v2107
  %v2147 = vpop.permute.xlu0 %2146
  %2150 = vset.pattern.permute.xlu0 0
  %2151 = vperm.xlu0 %2150, %v2108
  %v2152 = vpop.permute.xlu0 %2151
  %2155 = vset.pattern.permute.xlu0 0
  %2156 = vperm.xlu0 %2155, %v2109
  %v2157 = vpop.permute.xlu0 %2156
  %2160 = vset.pattern.permute.xlu0 0
  %2161 = vperm.xlu0 %2160, %v2110
  %v2162 = vpop.permute.xlu0 %2161
  %2165 = vset.pattern.permute.xlu0 0
  %2166 = vperm.xlu0 %2165, %v2111
  %v2167 = vpop.permute.xlu0 %2166
  %2170 = vset.pattern.permute.xlu0 0
  %2171 = vperm.xlu0 %2170, %v2112
  %v2172 = vpop.permute.xlu0 %2171
  %2175 = vset.pattern.permute.xlu0 0
  %2176 = vperm.xlu0 %2175, %v2113
  %v2177 = vpop.permute.xlu0 %2176
  %2180 = vset.pattern.permute.xlu0 0
  %2181 = vperm.xlu0 %2180, %v2114
  %v2182 = vpop.permute.xlu0 %2181
  %2185 = vset.pattern.permute.xlu0 0
  %2186 = vperm.xlu0 %2185, %v2115
  %v2187 = vpop.permute.xlu0 %2186
  %2190 = vset.pattern.permute.xlu0 0
  %2191 = vperm.xlu0 %2190, %v2116
  %v2192 = vpop.permute.xlu0 %2191
  %2195 = vset.pattern.permute.xlu0 0
  %2196 = vperm.xlu0 %2195, %v2117
  %v2197 = vpop.permute.xlu0 %2196
  %v2199 = vsel %vm2118, %v2122, %v1556
  %v2200 = vsel %vm2118, %v2127, %v1557
  %v2201 = vsel %vm2118, %v2132, %v1558
  %v2202 = vsel %vm2118, %v2137, %v1559
  %v2203 = vsel %vm2118, %v2142, %v1560
  %v2204 = vsel %vm2118, %v2147, %v1561
  %v2205 = vsel %vm2118, %v2152, %v1562
  %v2206 = vsel %vm2118, %v2157, %v1563
  %v2207 = vsel %vm2118, %v2162, %v1564
  %v2208 = vsel %vm2118, %v2167, %v1565
  %v2209 = vsel %vm2118, %v2172, %v1566
  %v2210 = vsel %vm2118, %v2177, %v1567
  %v2211 = vsel %vm2118, %v2182, %v1568
  %v2212 = vsel %vm2118, %v2187, %v1569
  %v2213 = vsel %vm2118, %v2192, %v1570
  %v2214 = vsel %vm2118, %v2197, %v1571
  %2215 = vrot.lane.b32.xlu0 %v256, 116
  %v2216 = vpop.permute.xlu0 %2215
  %2217 = vrot.lane.b32.xlu0 %v257, 116
  %v2218 = vpop.permute.xlu0 %2217
  %2219 = vrot.lane.b32.xlu0 %v258, 116
  %v2220 = vpop.permute.xlu0 %2219
  %2221 = vrot.lane.b32.xlu0 %v259, 116
  %v2222 = vpop.permute.xlu0 %2221
  %2223 = vrot.lane.b32.xlu0 %v260, 116
  %v2224 = vpop.permute.xlu0 %2223
  %2225 = vrot.lane.b32.xlu0 %v261, 116
  %v2226 = vpop.permute.xlu0 %2225
  %2227 = vrot.lane.b32.xlu0 %v262, 116
  %v2228 = vpop.permute.xlu0 %2227
  %2229 = vrot.lane.b32.xlu0 %v263, 116
  %v2230 = vpop.permute.xlu0 %2229
  %2231 = vrot.lane.b32.xlu0 %v264, 116
  %v2232 = vpop.permute.xlu0 %2231
  %2233 = vrot.lane.b32.xlu0 %v265, 116
  %v2234 = vpop.permute.xlu0 %2233
  %2235 = vrot.lane.b32.xlu0 %v266, 116
  %v2236 = vpop.permute.xlu0 %2235
  %2237 = vrot.lane.b32.xlu0 %v267, 116
  %v2238 = vpop.permute.xlu0 %2237
  %2239 = vrot.lane.b32.xlu0 %v268, 116
  %v2240 = vpop.permute.xlu0 %2239
  %2241 = vrot.lane.b32.xlu0 %v269, 116
  %v2242 = vpop.permute.xlu0 %2241
  %2243 = vrot.lane.b32.xlu0 %v270, 116
  %v2244 = vpop.permute.xlu0 %2243
  %2245 = vrot.lane.b32.xlu0 %v271, 116
  %v2246 = vpop.permute.xlu0 %2245
  %v2247 = vsel %vm272, %v2216, 0
  %v2249 = vsel %vm272, %v2218, 0
  %v2251 = vsel %vm272, %v2220, 0
  %v2253 = vsel %vm272, %v2222, 0
  %v2255 = vsel %vm272, %v2224, 0
  %v2257 = vsel %vm272, %v2226, 0
  %v2259 = vsel %vm272, %v2228, 0
  %v2261 = vsel %vm272, %v2230, 0
  %v2263 = vsel %vm272, %v2232, 0
  %v2265 = vsel %vm272, %v2234, 0
  %v2267 = vsel %vm272, %v2236, 0
  %v2269 = vsel %vm272, %v2238, 0
  %v2271 = vsel %vm272, %v2240, 0
  %v2273 = vsel %vm272, %v2242, 0
  %v2275 = vsel %vm272, %v2244, 0
  %v2277 = vsel %vm272, %v2246, 0
  %2279 = vmatprep.subr.mxu0 0.0
  %2280 = vmatpush1.msra.mxu0 0.0
  %2281 = vmatprep.subr.mxu0 0.0
  %2282 = vmatpush1.msra.mxu0 0.0
  %2283 = vmatprep.subr.mxu0 0.0
  %2284 = vmatpush1.msra.mxu0 0.0
  %2285 = vmatprep.subr.mxu0 0.0
  %2286 = vmatpush1.msra.mxu0 0.0
  %2287 = vmatprep.subr.mxu0 0.0
  %2288 = vmatpush1.msra.mxu0 0.0
  %2289 = vmatprep.subr.mxu0 0.0
  %2290 = vmatpush1.msra.mxu0 0.0
  %2291 = vmatprep.subr.mxu0 0.0
  %2292 = vmatpush1.msra.mxu0 0.0
  %2293 = vmatprep.subr.mxu0 0.0
  %2294 = vmatpush1.msra.mxu0 0.0
  %2295 = vmatprep.subr.mxu0 0.0
  %2296 = vmatpush1.msra.mxu0 0.0
  %2297 = vmatprep.subr.mxu0 0.0
  %2298 = vmatpush1.msra.mxu0 0.0
  %2299 = vmatprep.subr.mxu0 0.0
  %2300 = vmatpush1.msra.mxu0 0.0
  %2301 = vmatprep.subr.mxu0 0.0
  %2302 = vmatpush1.msra.mxu0 0.0
  %2303 = vmatprep.subr.mxu0 0.0
  %2304 = vmatpush1.msra.mxu0 0.0
  %2305 = vmatprep.subr.mxu0 0.0
  %2306 = vmatpush1.msra.mxu0 0.0
  %2307 = vmatprep.subr.mxu0 0.0
  %2308 = vmatpush1.msra.mxu0 0.0
  %2309 = vmatprep.subr.mxu0 0.0
  %2310 = vmatpush1.msra.mxu0 %v323
  %2311 = vmatprep.subr.mxu0 0.0
  %2312 = vmatpush2.msra.mxu0 0.0
  %2313 = vmatprep.subr.mxu0 0.0
  %2314 = vmatpush2.msra.mxu0 0.0
  %2315 = vmatprep.subr.mxu0 0.0
  %2316 = vmatpush2.msra.mxu0 0.0
  %2317 = vmatprep.subr.mxu0 0.0
  %2318 = vmatpush2.msra.mxu0 0.0
  %2319 = vmatprep.subr.mxu0 0.0
  %2320 = vmatpush2.msra.mxu0 0.0
  %2321 = vmatprep.subr.mxu0 0.0
  %2322 = vmatpush2.msra.mxu0 0.0
  %2323 = vmatprep.subr.mxu0 0.0
  %2324 = vmatpush2.msra.mxu0 0.0
  %2325 = vmatprep.subr.mxu0 0.0
  %2326 = vmatpush2.msra.mxu0 0.0
  %2327 = vmatprep.subr.mxu0 0.0
  %2328 = vmatpush2.msra.mxu0 0.0
  %2329 = vmatprep.subr.mxu0 0.0
  %2330 = vmatpush2.msra.mxu0 0.0
  %2331 = vmatprep.subr.mxu0 0.0
  %2332 = vmatpush2.msra.mxu0 0.0
  %2333 = vmatprep.subr.mxu0 0.0
  %2334 = vmatpush2.msra.mxu0 0.0
  %2335 = vmatprep.subr.mxu0 0.0
  %2336 = vmatpush2.msra.mxu0 0.0
  %2337 = vmatprep.subr.mxu0 0.0
  %2338 = vmatpush2.msra.mxu0 0.0
  %2339 = vmatprep.subr.mxu0 0.0
  %2340 = vmatpush2.msra.mxu0 0.0
  %2341 = vmatprep.subr.mxu0 0.0
  %2342 = vmatpush2.msra.mxu0 0.0
  %2343 = vmatprep.mubr.f32.mxu0 0.0
  %2344 = vmatmul.mubr.f32.gmra.mxu0 %v2247
  %v2345 = vpop.f32.mrf.mxu0
  %v2346 = vadd.f32 0.0, %v2345
  %v2347 = vpop.f32.mrf.mxu0
  %2348 = vmatprep.mubr.f32.mxu0 0.0
  %2349 = vmatmul.mubr.f32.gmra.mxu0 %v2249
  %v2350 = vpop.f32.mrf.mxu0
  %v2351 = vadd.f32 0.0, %v2350
  %v2352 = vpop.f32.mrf.mxu0
  %2353 = vmatprep.mubr.f32.mxu0 0.0
  %2354 = vmatmul.mubr.f32.gmra.mxu0 %v2251
  %v2355 = vpop.f32.mrf.mxu0
  %v2356 = vadd.f32 0.0, %v2355
  %v2357 = vpop.f32.mrf.mxu0
  %2358 = vmatprep.mubr.f32.mxu0 0.0
  %2359 = vmatmul.mubr.f32.gmra.mxu0 %v2253
  %v2360 = vpop.f32.mrf.mxu0
  %v2361 = vadd.f32 0.0, %v2360
  %v2362 = vpop.f32.mrf.mxu0
  %2363 = vmatprep.mubr.f32.mxu0 0.0
  %2364 = vmatmul.mubr.f32.gmra.mxu0 %v2255
  %v2365 = vpop.f32.mrf.mxu0
  %v2366 = vadd.f32 0.0, %v2365
  %v2367 = vpop.f32.mrf.mxu0
  %2368 = vmatprep.mubr.f32.mxu0 0.0
  %2369 = vmatmul.mubr.f32.gmra.mxu0 %v2257
  %v2370 = vpop.f32.mrf.mxu0
  %v2371 = vadd.f32 0.0, %v2370
  %v2372 = vpop.f32.mrf.mxu0
  %2373 = vmatprep.mubr.f32.mxu0 0.0
  %2374 = vmatmul.mubr.f32.gmra.mxu0 %v2259
  %v2375 = vpop.f32.mrf.mxu0
  %v2376 = vadd.f32 0.0, %v2375
  %v2377 = vpop.f32.mrf.mxu0
  %2378 = vmatprep.mubr.f32.mxu0 0.0
  %2379 = vmatmul.mubr.f32.gmra.mxu0 %v2261
  %v2380 = vpop.f32.mrf.mxu0
  %v2381 = vadd.f32 0.0, %v2380
  %v2382 = vpop.f32.mrf.mxu0
  %2383 = vmatprep.mubr.f32.mxu0 0.0
  %2384 = vmatmul.mubr.f32.gmra.mxu0 %v2263
  %v2385 = vpop.f32.mrf.mxu0
  %v2386 = vadd.f32 0.0, %v2385
  %v2387 = vpop.f32.mrf.mxu0
  %2388 = vmatprep.mubr.f32.mxu0 0.0
  %2389 = vmatmul.mubr.f32.gmra.mxu0 %v2265
  %v2390 = vpop.f32.mrf.mxu0
  %v2391 = vadd.f32 0.0, %v2390
  %v2392 = vpop.f32.mrf.mxu0
  %2393 = vmatprep.mubr.f32.mxu0 0.0
  %2394 = vmatmul.mubr.f32.gmra.mxu0 %v2267
  %v2395 = vpop.f32.mrf.mxu0
  %v2396 = vadd.f32 0.0, %v2395
  %v2397 = vpop.f32.mrf.mxu0
  %2398 = vmatprep.mubr.f32.mxu0 0.0
  %2399 = vmatmul.mubr.f32.gmra.mxu0 %v2269
  %v2400 = vpop.f32.mrf.mxu0
  %v2401 = vadd.f32 0.0, %v2400
  %v2402 = vpop.f32.mrf.mxu0
  %2403 = vmatprep.mubr.f32.mxu0 0.0
  %2404 = vmatmul.mubr.f32.gmra.mxu0 %v2271
  %v2405 = vpop.f32.mrf.mxu0
  %v2406 = vadd.f32 0.0, %v2405
  %v2407 = vpop.f32.mrf.mxu0
  %2408 = vmatprep.mubr.f32.mxu0 0.0
  %2409 = vmatmul.mubr.f32.gmra.mxu0 %v2273
  %v2410 = vpop.f32.mrf.mxu0
  %v2411 = vadd.f32 0.0, %v2410
  %v2412 = vpop.f32.mrf.mxu0
  %2413 = vmatprep.mubr.f32.mxu0 0.0
  %2414 = vmatmul.mubr.f32.gmra.mxu0 %v2275
  %v2415 = vpop.f32.mrf.mxu0
  %v2416 = vadd.f32 0.0, %v2415
  %v2417 = vpop.f32.mrf.mxu0
  %2418 = vmatprep.mubr.f32.mxu0 0.0
  %2419 = vmatmul.mubr.f32.gmra.mxu0 %v2277
  %v2420 = vpop.f32.mrf.mxu0
  %v2421 = vadd.f32 0.0, %v2420
  %v2422 = vpop.f32.mrf.mxu0
  %2423 = vdwg.mxu0
  %v2424 = vadd.f32 %v176, %v2346
  %v2425 = vadd.f32 %v181, %v2351
  %v2426 = vadd.f32 %v186, %v2356
  %v2427 = vadd.f32 %v191, %v2361
  %v2428 = vadd.f32 %v196, %v2366
  %v2429 = vadd.f32 %v201, %v2371
  %v2430 = vadd.f32 %v206, %v2376
  %v2431 = vadd.f32 %v211, %v2381
  %v2432 = vadd.f32 %v216, %v2386
  %v2433 = vadd.f32 %v221, %v2391
  %v2434 = vadd.f32 %v226, %v2396
  %v2435 = vadd.f32 %v231, %v2401
  %v2436 = vadd.f32 %v236, %v2406
  %v2437 = vadd.f32 %v241, %v2411
  %v2438 = vadd.f32 %v246, %v2416
  %v2439 = vadd.f32 %v251, %v2421
  %v2440 = vadd.f32 %v2424, %v490
  %v2441 = vadd.f32 %v2425, %v490
  %v2442 = vadd.f32 %v2426, %v490
  %v2443 = vadd.f32 %v2427, %v490
  %v2444 = vadd.f32 %v2428, %v490
  %v2445 = vadd.f32 %v2429, %v490
  %v2446 = vadd.f32 %v2430, %v490
  %v2447 = vadd.f32 %v2431, %v490
  %v2448 = vadd.f32 %v2432, %v490
  %v2449 = vadd.f32 %v2433, %v490
  %v2450 = vadd.f32 %v2434, %v490
  %v2451 = vadd.f32 %v2435, %v490
  %v2452 = vadd.f32 %v2436, %v490
  %v2453 = vadd.f32 %v2437, %v490
  %v2454 = vadd.f32 %v2438, %v490
  %v2455 = vadd.f32 %v2439, %v490
  %v2456 = vmax.f32 %v2440, 0.0
  %v2457 = vmax.f32 %v2441, 0.0
  %v2458 = vmax.f32 %v2442, 0.0
  %v2459 = vmax.f32 %v2443, 0.0
  %v2460 = vmax.f32 %v2444, 0.0
  %v2461 = vmax.f32 %v2445, 0.0
  %v2462 = vmax.f32 %v2446, 0.0
  %v2463 = vmax.f32 %v2447, 0.0
  %v2464 = vmax.f32 %v2448, 0.0
  %v2465 = vmax.f32 %v2449, 0.0
  %v2466 = vmax.f32 %v2450, 0.0
  %v2467 = vmax.f32 %v2451, 0.0
  %v2468 = vmax.f32 %v2452, 0.0
  %v2469 = vmax.f32 %v2453, 0.0
  %v2470 = vmax.f32 %v2454, 0.0
  %v2471 = vmax.f32 %v2455, 0.0
  %v2473 = vsel %vm530, %v2456, 0
  %v2476 = vsel %vm530, %v2457, 0
  %v2479 = vsel %vm530, %v2458, 0
  %v2482 = vsel %vm530, %v2459, 0
  %v2485 = vsel %vm530, %v2460, 0
  %v2488 = vsel %vm530, %v2461, 0
  %v2491 = vsel %vm530, %v2462, 0
  %v2494 = vsel %vm530, %v2463, 0
  %v2497 = vsel %vm530, %v2464, 0
  %v2500 = vsel %vm530, %v2465, 0
  %v2503 = vsel %vm530, %v2466, 0
  %v2506 = vsel %vm530, %v2467, 0
  %v2509 = vsel %vm530, %v2468, 0
  %v2512 = vsel %vm530, %v2469, 0
  %v2515 = vsel %vm530, %v2470, 0
  %v2518 = vsel %vm530, %v2471, 0
  %2520 = vmatprep.subr.mxu0 0.0
  %2521 = vmatpush1.msra.mxu0 0.0
  %2522 = vmatprep.subr.mxu0 0.0
  %2523 = vmatpush1.msra.mxu0 0.0
  %2524 = vmatprep.subr.mxu0 0.0
  %2525 = vmatpush1.msra.mxu0 0.0
  %2526 = vmatprep.subr.mxu0 0.0
  %2527 = vmatpush1.msra.mxu0 0.0
  %2528 = vmatprep.subr.mxu0 0.0
  %2529 = vmatpush1.msra.mxu0 0.0
  %2530 = vmatprep.subr.mxu0 0.0
  %2531 = vmatpush1.msra.mxu0 0.0
  %2532 = vmatprep.subr.mxu0 0.0
  %2533 = vmatpush1.msra.mxu0 0.0
  %2534 = vmatprep.subr.mxu0 0.0
  %2535 = vmatpush1.msra.mxu0 0.0
  %2536 = vmatprep.subr.mxu0 0.0
  %2537 = vmatpush1.msra.mxu0 0.0
  %2538 = vmatprep.subr.mxu0 0.0
  %2539 = vmatpush1.msra.mxu0 0.0
  %2540 = vmatprep.subr.mxu0 0.0
  %2541 = vmatpush1.msra.mxu0 0.0
  %2542 = vmatprep.subr.mxu0 0.0
  %2543 = vmatpush1.msra.mxu0 0.0
  %2544 = vmatprep.subr.mxu0 0.0
  %2545 = vmatpush1.msra.mxu0 %v39
  %2546 = vmatprep.subr.mxu0 0.0
  %2547 = vmatpush1.msra.mxu0 %v38
  %2548 = vmatprep.subr.mxu0 0.0
  %2549 = vmatpush1.msra.mxu0 %v37
  %2550 = vmatprep.subr.mxu0 0.0
  %2551 = vmatpush1.msra.mxu0 %v36
  %2552 = vmatprep.subr.mxu0 0.0
  %2553 = vmatpush2.msra.mxu0 0.0
  %2554 = vmatprep.subr.mxu0 0.0
  %2555 = vmatpush2.msra.mxu0 0.0
  %2556 = vmatprep.subr.mxu0 0.0
  %2557 = vmatpush2.msra.mxu0 0.0
  %2558 = vmatprep.subr.mxu0 0.0
  %2559 = vmatpush2.msra.mxu0 0.0
  %2560 = vmatprep.subr.mxu0 0.0
  %2561 = vmatpush2.msra.mxu0 0.0
  %2562 = vmatprep.subr.mxu0 0.0
  %2563 = vmatpush2.msra.mxu0 0.0
  %2564 = vmatprep.subr.mxu0 0.0
  %2565 = vmatpush2.msra.mxu0 0.0
  %2566 = vmatprep.subr.mxu0 0.0
  %2567 = vmatpush2.msra.mxu0 0.0
  %2568 = vmatprep.subr.mxu0 0.0
  %2569 = vmatpush2.msra.mxu0 0.0
  %2570 = vmatprep.subr.mxu0 0.0
  %2571 = vmatpush2.msra.mxu0 0.0
  %2572 = vmatprep.subr.mxu0 0.0
  %2573 = vmatpush2.msra.mxu0 0.0
  %2574 = vmatprep.subr.mxu0 0.0
  %2575 = vmatpush2.msra.mxu0 0.0
  %2576 = vmatprep.subr.mxu0 0.0
  %2577 = vmatpush2.msra.mxu0 0.0
  %2578 = vmatprep.subr.mxu0 0.0
  %2579 = vmatpush2.msra.mxu0 0.0
  %2580 = vmatprep.subr.mxu0 0.0
  %2581 = vmatpush2.msra.mxu0 0.0
  %2582 = vmatprep.subr.mxu0 0.0
  %2583 = vmatpush2.msra.mxu0 0.0
  %2584 = vmatprep.mubr.f32.mxu0 0.0
  %2585 = vmatmul.mubr.f32.gmra.mxu0 %v2473
  %v2586 = vpop.f32.mrf.mxu0
  %v2587 = vadd.f32 %v528, %v2586
  %v2588 = vpop.f32.mrf.mxu0
  %2589 = vmatprep.mubr.f32.mxu0 0.0
  %2590 = vmatmul.mubr.f32.gmra.mxu0 %v2476
  %v2591 = vpop.f32.mrf.mxu0
  %v2592 = vadd.f32 %v528, %v2591
  %v2593 = vpop.f32.mrf.mxu0
  %2594 = vmatprep.mubr.f32.mxu0 0.0
  %2595 = vmatmul.mubr.f32.gmra.mxu0 %v2479
  %v2596 = vpop.f32.mrf.mxu0
  %v2597 = vadd.f32 %v528, %v2596
  %v2598 = vpop.f32.mrf.mxu0
  %2599 = vmatprep.mubr.f32.mxu0 0.0
  %2600 = vmatmul.mubr.f32.gmra.mxu0 %v2482
  %v2601 = vpop.f32.mrf.mxu0
  %v2602 = vadd.f32 %v528, %v2601
  %v2603 = vpop.f32.mrf.mxu0
  %2604 = vmatprep.mubr.f32.mxu0 0.0
  %2605 = vmatmul.mubr.f32.gmra.mxu0 %v2485
  %v2606 = vpop.f32.mrf.mxu0
  %v2607 = vadd.f32 %v528, %v2606
  %v2608 = vpop.f32.mrf.mxu0
  %2609 = vmatprep.mubr.f32.mxu0 0.0
  %2610 = vmatmul.mubr.f32.gmra.mxu0 %v2488
  %v2611 = vpop.f32.mrf.mxu0
  %v2612 = vadd.f32 %v528, %v2611
  %v2613 = vpop.f32.mrf.mxu0
  %2614 = vmatprep.mubr.f32.mxu0 0.0
  %2615 = vmatmul.mubr.f32.gmra.mxu0 %v2491
  %v2616 = vpop.f32.mrf.mxu0
  %v2617 = vadd.f32 %v528, %v2616
  %v2618 = vpop.f32.mrf.mxu0
  %2619 = vmatprep.mubr.f32.mxu0 0.0
  %2620 = vmatmul.mubr.f32.gmra.mxu0 %v2494
  %v2621 = vpop.f32.mrf.mxu0
  %v2622 = vadd.f32 %v528, %v2621
  %v2623 = vpop.f32.mrf.mxu0
  %2624 = vmatprep.mubr.f32.mxu0 0.0
  %2625 = vmatmul.mubr.f32.gmra.mxu0 %v2497
  %v2626 = vpop.f32.mrf.mxu0
  %v2627 = vadd.f32 %v528, %v2626
  %v2628 = vpop.f32.mrf.mxu0
  %2629 = vmatprep.mubr.f32.mxu0 0.0
  %2630 = vmatmul.mubr.f32.gmra.mxu0 %v2500
  %v2631 = vpop.f32.mrf.mxu0
  %v2632 = vadd.f32 %v528, %v2631
  %v2633 = vpop.f32.mrf.mxu0
  %2634 = vmatprep.mubr.f32.mxu0 0.0
  %2635 = vmatmul.mubr.f32.gmra.mxu0 %v2503
  %v2636 = vpop.f32.mrf.mxu0
  %v2637 = vadd.f32 %v528, %v2636
  %v2638 = vpop.f32.mrf.mxu0
  %2639 = vmatprep.mubr.f32.mxu0 0.0
  %2640 = vmatmul.mubr.f32.gmra.mxu0 %v2506
  %v2641 = vpop.f32.mrf.mxu0
  %v2642 = vadd.f32 %v528, %v2641
  %v2643 = vpop.f32.mrf.mxu0
  %2644 = vmatprep.mubr.f32.mxu0 0.0
  %2645 = vmatmul.mubr.f32.gmra.mxu0 %v2509
  %v2646 = vpop.f32.mrf.mxu0
  %v2647 = vadd.f32 %v528, %v2646
  %v2648 = vpop.f32.mrf.mxu0
  %2649 = vmatprep.mubr.f32.mxu0 0.0
  %2650 = vmatmul.mubr.f32.gmra.mxu0 %v2512
  %v2651 = vpop.f32.mrf.mxu0
  %v2652 = vadd.f32 %v528, %v2651
  %v2653 = vpop.f32.mrf.mxu0
  %2654 = vmatprep.mubr.f32.mxu0 0.0
  %2655 = vmatmul.mubr.f32.gmra.mxu0 %v2515
  %v2656 = vpop.f32.mrf.mxu0
  %v2657 = vadd.f32 %v528, %v2656
  %v2658 = vpop.f32.mrf.mxu0
  %2659 = vmatprep.mubr.f32.mxu0 0.0
  %2660 = vmatmul.mubr.f32.gmra.mxu0 %v2518
  %v2661 = vpop.f32.mrf.mxu0
  %v2662 = vadd.f32 %v528, %v2661
  %v2663 = vpop.f32.mrf.mxu0
  %2664 = vdwg.mxu0
  %v2665 = vmax.f32 %v2587, 0.0
  %v2666 = vmax.f32 %v2592, 0.0
  %v2667 = vmax.f32 %v2597, 0.0
  %v2668 = vmax.f32 %v2602, 0.0
  %v2669 = vmax.f32 %v2607, 0.0
  %v2670 = vmax.f32 %v2612, 0.0
  %v2671 = vmax.f32 %v2617, 0.0
  %v2672 = vmax.f32 %v2622, 0.0
  %v2673 = vmax.f32 %v2627, 0.0
  %v2674 = vmax.f32 %v2632, 0.0
  %v2675 = vmax.f32 %v2637, 0.0
  %v2676 = vmax.f32 %v2642, 0.0
  %v2677 = vmax.f32 %v2647, 0.0
  %v2678 = vmax.f32 %v2652, 0.0
  %v2679 = vmax.f32 %v2657, 0.0
  %v2680 = vmax.f32 %v2662, 0.0
  %v2681 = vmul.f32 %v2665, %v744
  %v2682 = vmul.f32 %v2666, %v744
  %v2683 = vmul.f32 %v2667, %v744
  %v2684 = vmul.f32 %v2668, %v744
  %v2685 = vmul.f32 %v2669, %v744
  %v2686 = vmul.f32 %v2670, %v744
  %v2687 = vmul.f32 %v2671, %v744
  %v2688 = vmul.f32 %v2672, %v744
  %v2689 = vmul.f32 %v2673, %v744
  %v2690 = vmul.f32 %v2674, %v744
  %v2691 = vmul.f32 %v2675, %v744
  %v2692 = vmul.f32 %v2676, %v744
  %v2693 = vmul.f32 %v2677, %v744
  %v2694 = vmul.f32 %v2678, %v744
  %v2695 = vmul.f32 %v2679, %v744
  %v2696 = vmul.f32 %v2680, %v744
  %v2697 = vsel %vm530, %v2681, 0.0
  %2698 = vadd.xlane.f32.xlu0 %v2697
  %v2699 = vpop.xlane.xlu0 %2698
  %v2700 = vsel %vm530, %v2682, 0.0
  %2701 = vadd.xlane.f32.xlu0 %v2700
  %v2702 = vpop.xlane.xlu0 %2701
  %v2703 = vsel %vm530, %v2683, 0.0
  %2704 = vadd.xlane.f32.xlu0 %v2703
  %v2705 = vpop.xlane.xlu0 %2704
  %v2706 = vsel %vm530, %v2684, 0.0
  %2707 = vadd.xlane.f32.xlu0 %v2706
  %v2708 = vpop.xlane.xlu0 %2707
  %v2709 = vsel %vm530, %v2685, 0.0
  %2710 = vadd.xlane.f32.xlu0 %v2709
  %v2711 = vpop.xlane.xlu0 %2710
  %v2712 = vsel %vm530, %v2686, 0.0
  %2713 = vadd.xlane.f32.xlu0 %v2712
  %v2714 = vpop.xlane.xlu0 %2713
  %v2715 = vsel %vm530, %v2687, 0.0
  %2716 = vadd.xlane.f32.xlu0 %v2715
  %v2717 = vpop.xlane.xlu0 %2716
  %v2718 = vsel %vm530, %v2688, 0.0
  %2719 = vadd.xlane.f32.xlu0 %v2718
  %v2720 = vpop.xlane.xlu0 %2719
  %v2721 = vsel %vm530, %v2689, 0.0
  %2722 = vadd.xlane.f32.xlu0 %v2721
  %v2723 = vpop.xlane.xlu0 %2722
  %v2724 = vsel %vm530, %v2690, 0.0
  %2725 = vadd.xlane.f32.xlu0 %v2724
  %v2726 = vpop.xlane.xlu0 %2725
  %v2727 = vsel %vm530, %v2691, 0.0
  %2728 = vadd.xlane.f32.xlu0 %v2727
  %v2729 = vpop.xlane.xlu0 %2728
  %v2730 = vsel %vm530, %v2692, 0.0
  %2731 = vadd.xlane.f32.xlu0 %v2730
  %v2732 = vpop.xlane.xlu0 %2731
  %v2733 = vsel %vm530, %v2693, 0.0
  %2734 = vadd.xlane.f32.xlu0 %v2733
  %v2735 = vpop.xlane.xlu0 %2734
  %v2736 = vsel %vm530, %v2694, 0.0
  %2737 = vadd.xlane.f32.xlu0 %v2736
  %v2738 = vpop.xlane.xlu0 %2737
  %v2739 = vsel %vm530, %v2695, 0.0
  %2740 = vadd.xlane.f32.xlu0 %v2739
  %v2741 = vpop.xlane.xlu0 %2740
  %v2742 = vsel %vm530, %v2696, 0.0
  %2743 = vadd.xlane.f32.xlu0 %v2742
  %v2744 = vpop.xlane.xlu0 %2743
  %v2745 = vadd.f32 %v2699, %v814
  %v2746 = vadd.f32 %v2702, %v814
  %v2747 = vadd.f32 %v2705, %v814
  %v2748 = vadd.f32 %v2708, %v814
  %v2749 = vadd.f32 %v2711, %v814
  %v2750 = vadd.f32 %v2714, %v814
  %v2751 = vadd.f32 %v2717, %v814
  %v2752 = vadd.f32 %v2720, %v814
  %v2753 = vadd.f32 %v2723, %v814
  %v2754 = vadd.f32 %v2726, %v814
  %v2755 = vadd.f32 %v2729, %v814
  %v2756 = vadd.f32 %v2732, %v814
  %v2757 = vadd.f32 %v2735, %v814
  %v2758 = vadd.f32 %v2738, %v814
  %v2759 = vadd.f32 %v2741, %v814
  %v2760 = vadd.f32 %v2744, %v814
  %vm2761 = vcmp.eq.s32.totalorder %v255, 3
  %2763 = vset.pattern.permute.xlu0 0
  %2764 = vperm.xlu0 %2763, %v2745
  %v2765 = vpop.permute.xlu0 %2764
  %2768 = vset.pattern.permute.xlu0 0
  %2769 = vperm.xlu0 %2768, %v2746
  %v2770 = vpop.permute.xlu0 %2769
  %2773 = vset.pattern.permute.xlu0 0
  %2774 = vperm.xlu0 %2773, %v2747
  %v2775 = vpop.permute.xlu0 %2774
  %2778 = vset.pattern.permute.xlu0 0
  %2779 = vperm.xlu0 %2778, %v2748
  %v2780 = vpop.permute.xlu0 %2779
  %2783 = vset.pattern.permute.xlu0 0
  %2784 = vperm.xlu0 %2783, %v2749
  %v2785 = vpop.permute.xlu0 %2784
  %2788 = vset.pattern.permute.xlu0 0
  %2789 = vperm.xlu0 %2788, %v2750
  %v2790 = vpop.permute.xlu0 %2789
  %2793 = vset.pattern.permute.xlu0 0
  %2794 = vperm.xlu0 %2793, %v2751
  %v2795 = vpop.permute.xlu0 %2794
  %2798 = vset.pattern.permute.xlu0 0
  %2799 = vperm.xlu0 %2798, %v2752
  %v2800 = vpop.permute.xlu0 %2799
  %2803 = vset.pattern.permute.xlu0 0
  %2804 = vperm.xlu0 %2803, %v2753
  %v2805 = vpop.permute.xlu0 %2804
  %2808 = vset.pattern.permute.xlu0 0
  %2809 = vperm.xlu0 %2808, %v2754
  %v2810 = vpop.permute.xlu0 %2809
  %2813 = vset.pattern.permute.xlu0 0
  %2814 = vperm.xlu0 %2813, %v2755
  %v2815 = vpop.permute.xlu0 %2814
  %2818 = vset.pattern.permute.xlu0 0
  %2819 = vperm.xlu0 %2818, %v2756
  %v2820 = vpop.permute.xlu0 %2819
  %2823 = vset.pattern.permute.xlu0 0
  %2824 = vperm.xlu0 %2823, %v2757
  %v2825 = vpop.permute.xlu0 %2824
  %2828 = vset.pattern.permute.xlu0 0
  %2829 = vperm.xlu0 %2828, %v2758
  %v2830 = vpop.permute.xlu0 %2829
  %2833 = vset.pattern.permute.xlu0 0
  %2834 = vperm.xlu0 %2833, %v2759
  %v2835 = vpop.permute.xlu0 %2834
  %2838 = vset.pattern.permute.xlu0 0
  %2839 = vperm.xlu0 %2838, %v2760
  %v2840 = vpop.permute.xlu0 %2839
  %v2842 = vsel %vm2761, %v2765, %v2199
  %v2843 = vsel %vm2761, %v2770, %v2200
  %v2844 = vsel %vm2761, %v2775, %v2201
  %v2845 = vsel %vm2761, %v2780, %v2202
  %v2846 = vsel %vm2761, %v2785, %v2203
  %v2847 = vsel %vm2761, %v2790, %v2204
  %v2848 = vsel %vm2761, %v2795, %v2205
  %v2849 = vsel %vm2761, %v2800, %v2206
  %v2850 = vsel %vm2761, %v2805, %v2207
  %v2851 = vsel %vm2761, %v2810, %v2208
  %v2852 = vsel %vm2761, %v2815, %v2209
  %v2853 = vsel %vm2761, %v2820, %v2210
  %v2854 = vsel %vm2761, %v2825, %v2211
  %v2855 = vsel %vm2761, %v2830, %v2212
  %v2856 = vsel %vm2761, %v2835, %v2213
  %v2857 = vsel %vm2761, %v2840, %v2214
  %2858 = vst.msk [vmem:[%s9] sm:$0xff] %vm272, %v2842
  %2859 = vst.msk [vmem:[%s9 + $0x8] sm:$0xff] %vm272, %v2843
  %2860 = vst.msk [vmem:[%s9 + $0x10] sm:$0xff] %vm272, %v2844
  %2861 = vst.msk [vmem:[%s9 + $0x18] sm:$0xff] %vm272, %v2845
  %2862 = vst.msk [vmem:[%s9 + $0x20] sm:$0xff] %vm272, %v2846
  %2863 = vst.msk [vmem:[%s9 + $0x28] sm:$0xff] %vm272, %v2847
  %2864 = vst.msk [vmem:[%s9 + $0x30] sm:$0xff] %vm272, %v2848
  %2865 = vst.msk [vmem:[%s9 + $0x38] sm:$0xff] %vm272, %v2849
  %2866 = vst.msk [vmem:[%s9 + $0x40] sm:$0xff] %vm272, %v2850
  %2867 = vst.msk [vmem:[%s9 + $0x48] sm:$0xff] %vm272, %v2851
  %2868 = vst.msk [vmem:[%s9 + $0x50] sm:$0xff] %vm272, %v2852
  %2869 = vst.msk [vmem:[%s9 + $0x58] sm:$0xff] %vm272, %v2853
  %2870 = vst.msk [vmem:[%s9 + $0x60] sm:$0xff] %vm272, %v2854
  %2871 = vst.msk [vmem:[%s9 + $0x68] sm:$0xff] %vm272, %v2855
  %2872 = vst.msk [vmem:[%s9 + $0x70] sm:$0xff] %vm272, %v2856
  %2873 = vst.msk [vmem:[%s9 + $0x78] sm:$0xff] %vm272, %v2857
  // Predicated region
  $region38: #{tpu_custom_call.1} parent=0 // pred_check
    _
  $region39: #{tpu_custom_call.1} parent=0 // pred_check_branch
    %2875 = sbr.rel (0) target = $region41
  $region40: #{tpu_custom_call.1} parent=0 // pred_region
    _
  $region41: #{tpu_custom_call.1} parent=0 // pred_fallthru
    _
  // Predicated region
  $region42: #{tpu_custom_call.1} parent=0 // pred_check
    _
  $region43: #{tpu_custom_call.1} parent=0 // pred_check_branch
    %2877 = sbr.rel (0) target = $region45
  $region44: #{tpu_custom_call.1} parent=0 // pred_region
    _
  $region45: #{tpu_custom_call.1} parent=0 // pred_fallthru
    _

</llo_original>
